<compile_context>
chip_gen: v5e
topology: v5e:2x2
jax: 0.10.0
libtpu: 0.0.40
codegen_flags: <defaults>
</compile_context>

<pallas_src>
import functools

import jax
import jax.numpy as jnp
from jax.experimental import pallas as pl
from jax.experimental.pallas import tpu as pltpu


def _cab_kernel(x_ref, w1_ref, w2_ref, cam_ref, cab_ref, slope_ref,
                out_ref, xp_ref, *, H, W, C, KH, KW, PAD):
    """One image per grid step. Working layout (C, H*W): channels in sublanes,
    flattened spatial in lanes (lane-dense)."""
    HW = H * W
    ph, pw = KH // 2, KW // 2

    # ---- hoisted per-tap validity masks (shared by both convs) -------------
    # A tap at offset (dh, dw) reads flat lane i + d (d = dh*W + dw) of the
    # staged image; valid iff that flat index is inside the image AND the
    # column does not wrap across a row boundary.  Masking the INPUT view
    # makes the scratch's halo lanes "don't care" (no halo zeroing needed).
    lane = jax.lax.broadcasted_iota(jnp.int32, (1, HW), 1)
    wcol = lane % W
    taps = []                        # (flat_offset, mask-or-None) in weight order
    for kh in range(KH):
        for kw in range(KW):
            dh, dw = kh - ph, kw - pw
            d = dh * W + dw
            if dh == 0 and dw == 0:
                taps.append((d, None))
            else:
                m = (lane + d >= 0) & (lane + d < HW)          # image bounds
                if dw != 0:
                    m = m & (wcol + dw >= 0) & (wcol + dw < W)  # row wrap
                taps.append((d, m))

    def conv_fused(w_ref):
        # Same-padded KHxKW conv of the image currently staged in xp_ref, as a
        # single im2col matmul: concat the masked shifted lane-views along the
        # sublane axis -> (KH*KW*C, HW) bf16, then one MXU contraction of
        # depth KH*KW*C against the host-repacked fused weight.
        cols = []
        for d, m in taps:
            s = xp_ref[:, PAD + d:PAD + d + HW]                # (C, HW) bf16
            if m is not None:
                s = jnp.where(m, s, 0.0)
            cols.append(s)
        col = jnp.concatenate(cols, axis=0)                    # (KH*KW*C, HW)
        return jnp.dot(w_ref[...], col, preferred_element_type=jnp.float32)

    # Stage x (bf16 MXU operand) into the interior of the halo scratch.
    xp_ref[:, PAD:PAD + HW] = x_ref[...].astype(jnp.bfloat16)

    # conv1 -> PReLU (f32 elementwise)
    r = conv_fused(w1_ref)
    slope = slope_ref[0]
    r = jnp.where(r > 0.0, r, slope * r)

    # Re-stage the activation for conv2.
    xp_ref[:, PAD:PAD + HW] = r.astype(jnp.bfloat16)
    r = conv_fused(w2_ref)

    # Efficient channel attention, mean-first: mean(cam @ r) == cam @ mean(r),
    # so only the (C,1) pooled vector goes through the tiny band matmul.
    avg = jnp.mean(r, axis=1, keepdims=True)                   # (C, 1) f32
    avg_b = jnp.broadcast_to(avg, (C, 128))                    # lane-dense rhs
    y = jnp.dot(cam_ref[...], avg_b,
                preferred_element_type=jnp.float32)[:, 0:1] + cab_ref[0]
    gate = jax.nn.sigmoid(y)                                   # (C, 1)

    # Gated residual; full-width lane-dense aligned store.
    out_ref[...] = (r * gate + x_ref[...]).astype(out_ref.dtype)


def _eca_band_matrix(ca_w, C):
    """Banded (Toeplitz) matrix M with M[c, s] = ca_w[s - c + pad] (0 elsewhere),
    so Conv1d(1, 1, k, padding=(k-1)//2, bias=False)(avg) == M @ avg."""
    k = ca_w.shape[0]
    pad = (k - 1) // 2
    rows = jnp.arange(C)[:, None]
    cols = jnp.arange(C)[None, :]
    tap = cols - rows + pad
    valid = (tap >= 0) & (tap < k)
    return jnp.where(valid, ca_w[jnp.clip(tap, 0, k - 1)], 0.0).astype(jnp.float32)


def cab_forward(x_nchw, w1_oihw, w2_oihw, ca_w, ca_b, prelu_slope):
    """x_nchw: (N,C,H,W) f32 (PyTorch layout, used natively);
    w*_oihw: (C,C,KH,KW); ca_w: (k,); ca_b: (1,); prelu_slope: (1,)."""
    N, C, H, W = x_nchw.shape
    KH, KW = w1_oihw.shape[2], w1_oihw.shape[3]
    HW = H * W
    halo = (KH // 2) * W + (KW // 2)
    PAD = max(128, ((halo + 127) // 128) * 128)   # lane-aligned interior offset

    # Free reshape: NCHW row-major == (N, C, H*W) with spatial in the lane dim.
    x_flat = x_nchw.reshape(N, C, HW)

    # Fused im2col weights (C_out, KH*KW*C_in), tap-major / c_in-minor columns,
    # matching the in-kernel concatenation order; bf16 MXU operands.
    def repack(w):
        return (jnp.transpose(w, (0, 2, 3, 1))
                .reshape(C, KH * KW * C).astype(jnp.bfloat16))
    w1_f = repack(w1_oihw)
    w2_f = repack(w2_oihw)
    cam = _eca_band_matrix(ca_w, C)

    kernel = functools.partial(_cab_kernel, H=H, W=W, C=C, KH=KH, KW=KW, PAD=PAD)

    flops = N * (4 * KH * KW * C * C * HW      # two fused conv matmuls
                 + 2 * C * C * 128             # ECA band matmul (broadcast rhs)
                 + 8 * C * HW)                 # PReLU / gate / residual
    bytes_accessed = (2 * N * C * HW * 4       # x in + out (f32)
                      + 2 * C * KH * KW * C * 2  # fused bf16 weights
                      + C * C * 4 + 16)          # cam + scalars

    out_flat = pl.pallas_call(
        kernel,
        out_shape=jax.ShapeDtypeStruct((N, C, HW), x_nchw.dtype),
        grid_spec=pltpu.PrefetchScalarGridSpec(
            num_scalar_prefetch=0,
            grid=(N,),            # one image per step; shards over cores on megacore
            in_specs=[
                pl.BlockSpec((None, C, HW), lambda n: (n, 0, 0)),
                pl.BlockSpec((C, KH * KW * C), lambda n: (0, 0)),
                pl.BlockSpec((C, KH * KW * C), lambda n: (0, 0)),
                pl.BlockSpec((C, C), lambda n: (0, 0)),
                pl.BlockSpec(memory_space=pltpu.MemorySpace.SMEM),  # ECA conv bias
                pl.BlockSpec(memory_space=pltpu.MemorySpace.SMEM),  # PReLU slope
            ],
            out_specs=pl.BlockSpec((None, C, HW), lambda n: (n, 0, 0)),
            scratch_shapes=[
                pltpu.VMEM((C, HW + 2 * PAD), jnp.bfloat16),  # shared halo scratch
            ],
        ),
        compiler_params=pltpu.CompilerParams(
            dimension_semantics=("parallel",),
            vmem_limit_bytes=32 * 1024 * 1024),
        cost_estimate=pl.CostEstimate(
            flops=flops, transcendentals=N * C, bytes_accessed=bytes_accessed),
    )(x_flat, w1_f, w2_f, cam, ca_b, prelu_slope)

    return out_flat.reshape(N, C, H, W)


def _ref_cab(x_nchw, w1_oihw, w2_oihw, ca_w, ca_b, prelu_slope):
    """Pure-JAX f32 reference for correctness checking (matches PyTorch CAB)."""
    conv = lambda t, w: jax.lax.conv_general_dilated(
        t, w, (1, 1), "SAME", dimension_numbers=("NCHW", "OIHW", "NCHW"))
    r = conv(x_nchw, w1_oihw)
    r = jnp.where(r > 0, r, prelu_slope[0] * r)
    r = conv(r, w2_oihw)
    C = x_nchw.shape[1]
    avg = jnp.mean(r, axis=(2, 3))                         # (N, C)
    k = ca_w.shape[0]
    pad = (k - 1) // 2
    avgp = jnp.pad(avg, ((0, 0), (pad, pad)))
    y = sum(ca_w[j] * avgp[:, j:j + C] for j in range(k)) + ca_b[0]
    gate = jax.nn.sigmoid(y)[:, :, None, None]
    return r * gate + x_nchw


if __name__ == "__main__":
    key = jax.random.PRNGKey(0)
    N, C, H, W = 8, 16, 16, 16        # batch=8 -> >=4 pipelined steps per core
    KSZ, RED = 3, 3                   # conv kernel_size=3, ECA k_size=3
    k_x, k_w1, k_w2, k_cw, k_cb = jax.random.split(key, 5)

    # Pre-round x and conv weights to bf16-representable f32 so the kernel's
    # internal bf16 MXU-operand casts of these tensors are lossless; the only
    # approximation vs the f32 reference is the bf16 re-cast of the conv1
    # activation, which the relaxed tolerance covers.
    bf16_round = lambda t: t.astype(jnp.bfloat16).astype(jnp.float32)

    x = bf16_round(jax.random.normal(k_x, (N, C, H, W), jnp.float32))

    fan_in = C * KSZ * KSZ
    bound = 1.0 / (fan_in ** 0.5)
    w1 = bf16_round(jax.random.uniform(k_w1, (C, C, KSZ, KSZ), jnp.float32,
                                       -bound, bound))
    w2 = bf16_round(jax.random.uniform(k_w2, (C, C, KSZ, KSZ), jnp.float32,
                                       -bound, bound))
    ca_w = jax.random.uniform(k_cw, (RED,), jnp.float32, -1.0, 1.0) / (RED ** 0.5)
    ca_b = jax.random.uniform(k_cb, (1,), jnp.float32, -1.0, 1.0) / (RED ** 0.5)
    slope = jnp.full((1,), 0.25, jnp.float32)   # nn.PReLU() default slope

    out = jax.block_until_ready(cab_forward(x, w1, w2, ca_w, ca_b, slope))
    ref = _ref_cab(x, w1, w2, ca_w, ca_b, slope)
    assert out.shape == (N, C, H, W)
    err = float(jnp.max(jnp.abs(out - ref)))
    # bf16 MXU operands with f32 accumulation -> relaxed tolerance vs f32 ref.
    assert jnp.allclose(out, ref, atol=2e-2, rtol=2e-2), err
    print("KERNEL_OK")
</pallas_src>

<mosaic_0001>
module attributes {stable_mosaic.version = 11 : i64} {
  func.func @_cab_kernel(%arg0: i32, %arg1: memref<1x16x256xf32, #tpu.memory_space<vmem>>, %arg2: memref<16x144xbf16, #tpu.memory_space<vmem>>, %arg3: memref<16x144xbf16, #tpu.memory_space<vmem>>, %arg4: memref<16x16xf32, #tpu.memory_space<vmem>>, %arg5: memref<1xf32, #tpu.memory_space<smem>>, %arg6: memref<1xf32, #tpu.memory_space<smem>>, %arg7: memref<1x16x256xf32, #tpu.memory_space<vmem>>, %arg8: memref<16x512xbf16, #tpu.memory_space<vmem>>) attributes {dimension_semantics = [#tpu.dimension_semantics<parallel>], iteration_bounds = array<i64: 8>, scalar_prefetch = 0 : i64, scratch_operands = 1 : i64, tpu.core_type = #tpu.core_type<tc>, window_params = [{transform_indices = @transform_0, window_bounds = array<i64: 1, 16, 256>}, {pipeline_mode = #tpu.pipeline_mode<synchronous>, transform_indices = @transform_1, window_bounds = array<i64: 16, 144>}, {pipeline_mode = #tpu.pipeline_mode<synchronous>, transform_indices = @transform_2, window_bounds = array<i64: 16, 144>}, {pipeline_mode = #tpu.pipeline_mode<synchronous>, transform_indices = @transform_3, window_bounds = array<i64: 16, 16>}, {transform_indices = @transform_4, window_bounds = array<i64: 1>}, {transform_indices = @transform_5, window_bounds = array<i64: 1>}, {transform_indices = @transform_6, window_bounds = array<i64: 1, 16, 256>}]} {
    %0 = tpu.iota {dimensions = array<i32: 1>} : vector<1x256xi32>
    %c16_i32 = arith.constant 16 : i32
    %c0_i32 = arith.constant 0 : i32
    %1 = arith.cmpi eq, %c16_i32, %c0_i32 : i32
    %c1_i32 = arith.constant 1 : i32
    %2 = arith.select %1, %c1_i32, %c16_i32 : i32
    %3 = vector.broadcast %2 : i32 to vector<1x256xi32>
    %4 = arith.remsi %0, %3 : vector<1x256xi32>
    %c0_i32_0 = arith.constant 0 : i32
    %5 = vector.broadcast %c0_i32_0 : i32 to vector<1x256xi32>
    %6 = arith.cmpi ne, %4, %5 : vector<1x256xi32>
    %c0_i32_1 = arith.constant 0 : i32
    %7 = vector.broadcast %c0_i32_1 : i32 to vector<1x256xi32>
    %8 = arith.cmpi slt, %4, %7 : vector<1x256xi32>
    %c0_i32_2 = arith.constant 0 : i32
    %9 = arith.cmpi slt, %2, %c0_i32_2 : i32
    %10 = vector.broadcast %9 : i1 to vector<1x256xi1>
    %11 = vector.broadcast %10 : vector<1x256xi1> to vector<1x256xi1>
    %12 = arith.xori %8, %11 : vector<1x256xi1>
    %13 = arith.andi %12, %6 : vector<1x256xi1>
    %14 = vector.broadcast %2 : i32 to vector<1x256xi32>
    %15 = arith.addi %4, %14 : vector<1x256xi32>
    %16 = arith.select %13, %15, %4 : vector<1x256xi1>, vector<1x256xi32>
    %c-17_i32 = arith.constant -17 : i32
    %17 = vector.broadcast %c-17_i32 : i32 to vector<1x256xi32>
    %18 = arith.addi %0, %17 : vector<1x256xi32>
    %c0_i32_3 = arith.constant 0 : i32
    %19 = vector.broadcast %c0_i32_3 : i32 to vector<1x256xi32>
    %20 = arith.cmpi sge, %18, %19 : vector<1x256xi32>
    %c-17_i32_4 = arith.constant -17 : i32
    %21 = vector.broadcast %c-17_i32_4 : i32 to vector<1x256xi32>
    %22 = arith.addi %0, %21 : vector<1x256xi32>
    %c256_i32 = arith.constant 256 : i32
    %23 = vector.broadcast %c256_i32 : i32 to vector<1x256xi32>
    %24 = arith.cmpi slt, %22, %23 : vector<1x256xi32>
    %25 = arith.andi %20, %24 : vector<1x256xi1>
    %c-1_i32 = arith.constant -1 : i32
    %26 = vector.broadcast %c-1_i32 : i32 to vector<1x256xi32>
    %27 = arith.addi %16, %26 : vector<1x256xi32>
    %c0_i32_5 = arith.constant 0 : i32
    %28 = vector.broadcast %c0_i32_5 : i32 to vector<1x256xi32>
    %29 = arith.cmpi sge, %27, %28 : vector<1x256xi32>
    %30 = arith.andi %25, %29 : vector<1x256xi1>
    %c-1_i32_6 = arith.constant -1 : i32
    %31 = vector.broadcast %c-1_i32_6 : i32 to vector<1x256xi32>
    %32 = arith.addi %16, %31 : vector<1x256xi32>
    %c16_i32_7 = arith.constant 16 : i32
    %33 = vector.broadcast %c16_i32_7 : i32 to vector<1x256xi32>
    %34 = arith.cmpi slt, %32, %33 : vector<1x256xi32>
    %35 = arith.andi %30, %34 : vector<1x256xi1>
    %c-16_i32 = arith.constant -16 : i32
    %36 = vector.broadcast %c-16_i32 : i32 to vector<1x256xi32>
    %37 = arith.addi %0, %36 : vector<1x256xi32>
    %c0_i32_8 = arith.constant 0 : i32
    %38 = vector.broadcast %c0_i32_8 : i32 to vector<1x256xi32>
    %39 = arith.cmpi sge, %37, %38 : vector<1x256xi32>
    %c-16_i32_9 = arith.constant -16 : i32
    %40 = vector.broadcast %c-16_i32_9 : i32 to vector<1x256xi32>
    %41 = arith.addi %0, %40 : vector<1x256xi32>
    %c256_i32_10 = arith.constant 256 : i32
    %42 = vector.broadcast %c256_i32_10 : i32 to vector<1x256xi32>
    %43 = arith.cmpi slt, %41, %42 : vector<1x256xi32>
    %44 = arith.andi %39, %43 : vector<1x256xi1>
    %c-15_i32 = arith.constant -15 : i32
    %45 = vector.broadcast %c-15_i32 : i32 to vector<1x256xi32>
    %46 = arith.addi %0, %45 : vector<1x256xi32>
    %c0_i32_11 = arith.constant 0 : i32
    %47 = vector.broadcast %c0_i32_11 : i32 to vector<1x256xi32>
    %48 = arith.cmpi sge, %46, %47 : vector<1x256xi32>
    %c-15_i32_12 = arith.constant -15 : i32
    %49 = vector.broadcast %c-15_i32_12 : i32 to vector<1x256xi32>
    %50 = arith.addi %0, %49 : vector<1x256xi32>
    %c256_i32_13 = arith.constant 256 : i32
    %51 = vector.broadcast %c256_i32_13 : i32 to vector<1x256xi32>
    %52 = arith.cmpi slt, %50, %51 : vector<1x256xi32>
    %53 = arith.andi %48, %52 : vector<1x256xi1>
    %c1_i32_14 = arith.constant 1 : i32
    %54 = vector.broadcast %c1_i32_14 : i32 to vector<1x256xi32>
    %55 = arith.addi %16, %54 : vector<1x256xi32>
    %c0_i32_15 = arith.constant 0 : i32
    %56 = vector.broadcast %c0_i32_15 : i32 to vector<1x256xi32>
    %57 = arith.cmpi sge, %55, %56 : vector<1x256xi32>
    %58 = arith.andi %53, %57 : vector<1x256xi1>
    %c1_i32_16 = arith.constant 1 : i32
    %59 = vector.broadcast %c1_i32_16 : i32 to vector<1x256xi32>
    %60 = arith.addi %16, %59 : vector<1x256xi32>
    %c16_i32_17 = arith.constant 16 : i32
    %61 = vector.broadcast %c16_i32_17 : i32 to vector<1x256xi32>
    %62 = arith.cmpi slt, %60, %61 : vector<1x256xi32>
    %63 = arith.andi %58, %62 : vector<1x256xi1>
    %c-1_i32_18 = arith.constant -1 : i32
    %64 = vector.broadcast %c-1_i32_18 : i32 to vector<1x256xi32>
    %65 = arith.addi %0, %64 : vector<1x256xi32>
    %c0_i32_19 = arith.constant 0 : i32
    %66 = vector.broadcast %c0_i32_19 : i32 to vector<1x256xi32>
    %67 = arith.cmpi sge, %65, %66 : vector<1x256xi32>
    %c-1_i32_20 = arith.constant -1 : i32
    %68 = vector.broadcast %c-1_i32_20 : i32 to vector<1x256xi32>
    %69 = arith.addi %0, %68 : vector<1x256xi32>
    %c256_i32_21 = arith.constant 256 : i32
    %70 = vector.broadcast %c256_i32_21 : i32 to vector<1x256xi32>
    %71 = arith.cmpi slt, %69, %70 : vector<1x256xi32>
    %72 = arith.andi %67, %71 : vector<1x256xi1>
    %c-1_i32_22 = arith.constant -1 : i32
    %73 = vector.broadcast %c-1_i32_22 : i32 to vector<1x256xi32>
    %74 = arith.addi %16, %73 : vector<1x256xi32>
    %c0_i32_23 = arith.constant 0 : i32
    %75 = vector.broadcast %c0_i32_23 : i32 to vector<1x256xi32>
    %76 = arith.cmpi sge, %74, %75 : vector<1x256xi32>
    %77 = arith.andi %72, %76 : vector<1x256xi1>
    %c-1_i32_24 = arith.constant -1 : i32
    %78 = vector.broadcast %c-1_i32_24 : i32 to vector<1x256xi32>
    %79 = arith.addi %16, %78 : vector<1x256xi32>
    %c16_i32_25 = arith.constant 16 : i32
    %80 = vector.broadcast %c16_i32_25 : i32 to vector<1x256xi32>
    %81 = arith.cmpi slt, %79, %80 : vector<1x256xi32>
    %82 = arith.andi %77, %81 : vector<1x256xi1>
    %c1_i32_26 = arith.constant 1 : i32
    %83 = vector.broadcast %c1_i32_26 : i32 to vector<1x256xi32>
    %84 = arith.addi %0, %83 : vector<1x256xi32>
    %c0_i32_27 = arith.constant 0 : i32
    %85 = vector.broadcast %c0_i32_27 : i32 to vector<1x256xi32>
    %86 = arith.cmpi sge, %84, %85 : vector<1x256xi32>
    %c1_i32_28 = arith.constant 1 : i32
    %87 = vector.broadcast %c1_i32_28 : i32 to vector<1x256xi32>
    %88 = arith.addi %0, %87 : vector<1x256xi32>
    %c256_i32_29 = arith.constant 256 : i32
    %89 = vector.broadcast %c256_i32_29 : i32 to vector<1x256xi32>
    %90 = arith.cmpi slt, %88, %89 : vector<1x256xi32>
    %91 = arith.andi %86, %90 : vector<1x256xi1>
    %c1_i32_30 = arith.constant 1 : i32
    %92 = vector.broadcast %c1_i32_30 : i32 to vector<1x256xi32>
    %93 = arith.addi %16, %92 : vector<1x256xi32>
    %c0_i32_31 = arith.constant 0 : i32
    %94 = vector.broadcast %c0_i32_31 : i32 to vector<1x256xi32>
    %95 = arith.cmpi sge, %93, %94 : vector<1x256xi32>
    %96 = arith.andi %91, %95 : vector<1x256xi1>
    %c1_i32_32 = arith.constant 1 : i32
    %97 = vector.broadcast %c1_i32_32 : i32 to vector<1x256xi32>
    %98 = arith.addi %16, %97 : vector<1x256xi32>
    %c16_i32_33 = arith.constant 16 : i32
    %99 = vector.broadcast %c16_i32_33 : i32 to vector<1x256xi32>
    %100 = arith.cmpi slt, %98, %99 : vector<1x256xi32>
    %101 = arith.andi %96, %100 : vector<1x256xi1>
    %c15_i32 = arith.constant 15 : i32
    %102 = vector.broadcast %c15_i32 : i32 to vector<1x256xi32>
    %103 = arith.addi %0, %102 : vector<1x256xi32>
    %c0_i32_34 = arith.constant 0 : i32
    %104 = vector.broadcast %c0_i32_34 : i32 to vector<1x256xi32>
    %105 = arith.cmpi sge, %103, %104 : vector<1x256xi32>
    %c15_i32_35 = arith.constant 15 : i32
    %106 = vector.broadcast %c15_i32_35 : i32 to vector<1x256xi32>
    %107 = arith.addi %0, %106 : vector<1x256xi32>
    %c256_i32_36 = arith.constant 256 : i32
    %108 = vector.broadcast %c256_i32_36 : i32 to vector<1x256xi32>
    %109 = arith.cmpi slt, %107, %108 : vector<1x256xi32>
    %110 = arith.andi %105, %109 : vector<1x256xi1>
    %c-1_i32_37 = arith.constant -1 : i32
    %111 = vector.broadcast %c-1_i32_37 : i32 to vector<1x256xi32>
    %112 = arith.addi %16, %111 : vector<1x256xi32>
    %c0_i32_38 = arith.constant 0 : i32
    %113 = vector.broadcast %c0_i32_38 : i32 to vector<1x256xi32>
    %114 = arith.cmpi sge, %112, %113 : vector<1x256xi32>
    %115 = arith.andi %110, %114 : vector<1x256xi1>
    %c-1_i32_39 = arith.constant -1 : i32
    %116 = vector.broadcast %c-1_i32_39 : i32 to vector<1x256xi32>
    %117 = arith.addi %16, %116 : vector<1x256xi32>
    %c16_i32_40 = arith.constant 16 : i32
    %118 = vector.broadcast %c16_i32_40 : i32 to vector<1x256xi32>
    %119 = arith.cmpi slt, %117, %118 : vector<1x256xi32>
    %120 = arith.andi %115, %119 : vector<1x256xi1>
    %c16_i32_41 = arith.constant 16 : i32
    %121 = vector.broadcast %c16_i32_41 : i32 to vector<1x256xi32>
    %122 = arith.addi %0, %121 : vector<1x256xi32>
    %c0_i32_42 = arith.constant 0 : i32
    %123 = vector.broadcast %c0_i32_42 : i32 to vector<1x256xi32>
    %124 = arith.cmpi sge, %122, %123 : vector<1x256xi32>
    %c16_i32_43 = arith.constant 16 : i32
    %125 = vector.broadcast %c16_i32_43 : i32 to vector<1x256xi32>
    %126 = arith.addi %0, %125 : vector<1x256xi32>
    %c256_i32_44 = arith.constant 256 : i32
    %127 = vector.broadcast %c256_i32_44 : i32 to vector<1x256xi32>
    %128 = arith.cmpi slt, %126, %127 : vector<1x256xi32>
    %129 = arith.andi %124, %128 : vector<1x256xi1>
    %c17_i32 = arith.constant 17 : i32
    %130 = vector.broadcast %c17_i32 : i32 to vector<1x256xi32>
    %131 = arith.addi %0, %130 : vector<1x256xi32>
    %c0_i32_45 = arith.constant 0 : i32
    %132 = vector.broadcast %c0_i32_45 : i32 to vector<1x256xi32>
    %133 = arith.cmpi sge, %131, %132 : vector<1x256xi32>
    %c17_i32_46 = arith.constant 17 : i32
    %134 = vector.broadcast %c17_i32_46 : i32 to vector<1x256xi32>
    %135 = arith.addi %0, %134 : vector<1x256xi32>
    %c256_i32_47 = arith.constant 256 : i32
    %136 = vector.broadcast %c256_i32_47 : i32 to vector<1x256xi32>
    %137 = arith.cmpi slt, %135, %136 : vector<1x256xi32>
    %138 = arith.andi %133, %137 : vector<1x256xi1>
    %c1_i32_48 = arith.constant 1 : i32
    %139 = vector.broadcast %c1_i32_48 : i32 to vector<1x256xi32>
    %140 = arith.addi %16, %139 : vector<1x256xi32>
    %c0_i32_49 = arith.constant 0 : i32
    %141 = vector.broadcast %c0_i32_49 : i32 to vector<1x256xi32>
    %142 = arith.cmpi sge, %140, %141 : vector<1x256xi32>
    %143 = arith.andi %138, %142 : vector<1x256xi1>
    %c1_i32_50 = arith.constant 1 : i32
    %144 = vector.broadcast %c1_i32_50 : i32 to vector<1x256xi32>
    %145 = arith.addi %16, %144 : vector<1x256xi32>
    %c16_i32_51 = arith.constant 16 : i32
    %146 = vector.broadcast %c16_i32_51 : i32 to vector<1x256xi32>
    %147 = arith.cmpi slt, %145, %146 : vector<1x256xi32>
    %148 = arith.andi %143, %147 : vector<1x256xi1>
    %c0 = arith.constant 0 : index
    %c0_52 = arith.constant 0 : index
    %c0_53 = arith.constant 0 : index
    %149 = vector.load %arg1[%c0, %c0_52, %c0_53] : memref<1x16x256xf32, #tpu.memory_space<vmem>>, vector<1x16x256xf32>
    %150 = vector.shape_cast %149 : vector<1x16x256xf32> to vector<16x256xf32>
    %151 = arith.truncf %150 : vector<16x256xf32> to vector<16x256xbf16>
    %c0_54 = arith.constant 0 : index
    %c128 = arith.constant 128 : index
    %152 = vector.load %arg8[%c0_54, %c128] : memref<16x512xbf16, #tpu.memory_space<vmem>>, vector<16x256xbf16>
    tpu.vector_store %arg8[%c0_54, %c128], %151 {strides = array<i32>} : memref<16x512xbf16, #tpu.memory_space<vmem>>, vector<16x256xbf16>,
    %c0_55 = arith.constant 0 : index
    %c111 = arith.constant 111 : index
    %153 = vector.load %arg8[%c0_55, %c111] : memref<16x512xbf16, #tpu.memory_space<vmem>>, vector<16x256xbf16>
    %cst = arith.constant 0.000000e+00 : f32
    %154 = arith.truncf %cst : f32 to bf16
    %155 = vector.shape_cast %35 : vector<1x256xi1> to vector<1x256xi1>
    %156 = vector.broadcast %155 : vector<1x256xi1> to vector<16x256xi1>
    %157 = vector.broadcast %154 : bf16 to vector<16x256xbf16>
    %158 = arith.select %156, %153, %157 : vector<16x256xi1>, vector<16x256xbf16>
    %c0_56 = arith.constant 0 : index
    %c112 = arith.constant 112 : index
    %159 = vector.load %arg8[%c0_56, %c112] : memref<16x512xbf16, #tpu.memory_space<vmem>>, vector<16x256xbf16>
    %cst_57 = arith.constant 0.000000e+00 : f32
    %160 = arith.truncf %cst_57 : f32 to bf16
    %161 = vector.shape_cast %44 : vector<1x256xi1> to vector<1x256xi1>
    %162 = vector.broadcast %161 : vector<1x256xi1> to vector<16x256xi1>
    %163 = vector.broadcast %160 : bf16 to vector<16x256xbf16>
    %164 = arith.select %162, %159, %163 : vector<16x256xi1>, vector<16x256xbf16>
    %c0_58 = arith.constant 0 : index
    %c113 = arith.constant 113 : index
    %165 = vector.load %arg8[%c0_58, %c113] : memref<16x512xbf16, #tpu.memory_space<vmem>>, vector<16x256xbf16>
    %cst_59 = arith.constant 0.000000e+00 : f32
    %166 = arith.truncf %cst_59 : f32 to bf16
    %167 = vector.shape_cast %63 : vector<1x256xi1> to vector<1x256xi1>
    %168 = vector.broadcast %167 : vector<1x256xi1> to vector<16x256xi1>
    %169 = vector.broadcast %166 : bf16 to vector<16x256xbf16>
    %170 = arith.select %168, %165, %169 : vector<16x256xi1>, vector<16x256xbf16>
    %c0_60 = arith.constant 0 : index
    %c127 = arith.constant 127 : index
    %171 = vector.load %arg8[%c0_60, %c127] : memref<16x512xbf16, #tpu.memory_space<vmem>>, vector<16x256xbf16>
    %cst_61 = arith.constant 0.000000e+00 : f32
    %172 = arith.truncf %cst_61 : f32 to bf16
    %173 = vector.shape_cast %82 : vector<1x256xi1> to vector<1x256xi1>
    %174 = vector.broadcast %173 : vector<1x256xi1> to vector<16x256xi1>
    %175 = vector.broadcast %172 : bf16 to vector<16x256xbf16>
    %176 = arith.select %174, %171, %175 : vector<16x256xi1>, vector<16x256xbf16>
    %c0_62 = arith.constant 0 : index
    %c128_63 = arith.constant 128 : index
    %177 = vector.load %arg8[%c0_62, %c128_63] : memref<16x512xbf16, #tpu.memory_space<vmem>>, vector<16x256xbf16>
    %c0_64 = arith.constant 0 : index
    %c129 = arith.constant 129 : index
    %178 = vector.load %arg8[%c0_64, %c129] : memref<16x512xbf16, #tpu.memory_space<vmem>>, vector<16x256xbf16>
    %cst_65 = arith.constant 0.000000e+00 : f32
    %179 = arith.truncf %cst_65 : f32 to bf16
    %180 = vector.shape_cast %101 : vector<1x256xi1> to vector<1x256xi1>
    %181 = vector.broadcast %180 : vector<1x256xi1> to vector<16x256xi1>
    %182 = vector.broadcast %179 : bf16 to vector<16x256xbf16>
    %183 = arith.select %181, %178, %182 : vector<16x256xi1>, vector<16x256xbf16>
    %c0_66 = arith.constant 0 : index
    %c143 = arith.constant 143 : index
    %184 = vector.load %arg8[%c0_66, %c143] : memref<16x512xbf16, #tpu.memory_space<vmem>>, vector<16x256xbf16>
    %cst_67 = arith.constant 0.000000e+00 : f32
    %185 = arith.truncf %cst_67 : f32 to bf16
    %186 = vector.shape_cast %120 : vector<1x256xi1> to vector<1x256xi1>
    %187 = vector.broadcast %186 : vector<1x256xi1> to vector<16x256xi1>
    %188 = vector.broadcast %185 : bf16 to vector<16x256xbf16>
    %189 = arith.select %187, %184, %188 : vector<16x256xi1>, vector<16x256xbf16>
    %c0_68 = arith.constant 0 : index
    %c144 = arith.constant 144 : index
    %190 = vector.load %arg8[%c0_68, %c144] : memref<16x512xbf16, #tpu.memory_space<vmem>>, vector<16x256xbf16>
    %cst_69 = arith.constant 0.000000e+00 : f32
    %191 = arith.truncf %cst_69 : f32 to bf16
    %192 = vector.shape_cast %129 : vector<1x256xi1> to vector<1x256xi1>
    %193 = vector.broadcast %192 : vector<1x256xi1> to vector<16x256xi1>
    %194 = vector.broadcast %191 : bf16 to vector<16x256xbf16>
    %195 = arith.select %193, %190, %194 : vector<16x256xi1>, vector<16x256xbf16>
    %c0_70 = arith.constant 0 : index
    %c145 = arith.constant 145 : index
    %196 = vector.load %arg8[%c0_70, %c145] : memref<16x512xbf16, #tpu.memory_space<vmem>>, vector<16x256xbf16>
    %cst_71 = arith.constant 0.000000e+00 : f32
    %197 = arith.truncf %cst_71 : f32 to bf16
    %198 = vector.shape_cast %148 : vector<1x256xi1> to vector<1x256xi1>
    %199 = vector.broadcast %198 : vector<1x256xi1> to vector<16x256xi1>
    %200 = vector.broadcast %197 : bf16 to vector<16x256xbf16>
    %201 = arith.select %199, %196, %200 : vector<16x256xi1>, vector<16x256xbf16>
    %202 = tpu.concatenate %158, %164, %170, %176, %177, %183, %189, %195, %201 in 0 : vector<16x256xbf16>, vector<16x256xbf16>, vector<16x256xbf16>, vector<16x256xbf16>, vector<16x256xbf16>, vector<16x256xbf16>, vector<16x256xbf16>, vector<16x256xbf16>, vector<16x256xbf16> -> vector<144x256xbf16>
    %c0_72 = arith.constant 0 : index
    %c0_73 = arith.constant 0 : index
    %203 = vector.load %arg2[%c0_72, %c0_73] : memref<16x144xbf16, #tpu.memory_space<vmem>>, vector<16x144xbf16>
    %cst_74 = arith.constant dense<0.000000e+00> : vector<16x256xf32>
    %204 = tpu.matmul %203, %202, %cst_74 {dimension_numbers = #tpu.dot_dimension_numbers<[1], [0], [0], [1], [0, 0, 1, 1], [], []>} : vector<16x144xbf16>, vector<144x256xbf16>, vector<16x256xf32> -> vector<16x256xf32>
    %c0_75 = arith.constant 0 : index
    %205 = memref.load %arg6[%c0_75] : memref<1xf32, #tpu.memory_space<smem>>
    %cst_76 = arith.constant 0.000000e+00 : f32
    %206 = vector.broadcast %cst_76 : f32 to vector<16x256xf32>
    %207 = arith.cmpf ogt, %204, %206 : vector<16x256xf32>
    %208 = vector.broadcast %205 : f32 to vector<16x256xf32>
    %209 = arith.mulf %208, %204 : vector<16x256xf32>
    %210 = arith.select %207, %204, %209 : vector<16x256xi1>, vector<16x256xf32>
    %211 = arith.truncf %210 : vector<16x256xf32> to vector<16x256xbf16>
    %c0_77 = arith.constant 0 : index
    %c128_78 = arith.constant 128 : index
    %212 = vector.load %arg8[%c0_77, %c128_78] : memref<16x512xbf16, #tpu.memory_space<vmem>>, vector<16x256xbf16>
    tpu.vector_store %arg8[%c0_77, %c128_78], %211 {strides = array<i32>} : memref<16x512xbf16, #tpu.memory_space<vmem>>, vector<16x256xbf16>,
    %c0_79 = arith.constant 0 : index
    %c111_80 = arith.constant 111 : index
    %213 = vector.load %arg8[%c0_79, %c111_80] : memref<16x512xbf16, #tpu.memory_space<vmem>>, vector<16x256xbf16>
    %cst_81 = arith.constant 0.000000e+00 : f32
    %214 = arith.truncf %cst_81 : f32 to bf16
    %215 = vector.shape_cast %35 : vector<1x256xi1> to vector<1x256xi1>
    %216 = vector.broadcast %215 : vector<1x256xi1> to vector<16x256xi1>
    %217 = vector.broadcast %214 : bf16 to vector<16x256xbf16>
    %218 = arith.select %216, %213, %217 : vector<16x256xi1>, vector<16x256xbf16>
    %c0_82 = arith.constant 0 : index
    %c112_83 = arith.constant 112 : index
    %219 = vector.load %arg8[%c0_82, %c112_83] : memref<16x512xbf16, #tpu.memory_space<vmem>>, vector<16x256xbf16>
    %cst_84 = arith.constant 0.000000e+00 : f32
    %220 = arith.truncf %cst_84 : f32 to bf16
    %221 = vector.shape_cast %44 : vector<1x256xi1> to vector<1x256xi1>
    %222 = vector.broadcast %221 : vector<1x256xi1> to vector<16x256xi1>
    %223 = vector.broadcast %220 : bf16 to vector<16x256xbf16>
    %224 = arith.select %222, %219, %223 : vector<16x256xi1>, vector<16x256xbf16>
    %c0_85 = arith.constant 0 : index
    %c113_86 = arith.constant 113 : index
    %225 = vector.load %arg8[%c0_85, %c113_86] : memref<16x512xbf16, #tpu.memory_space<vmem>>, vector<16x256xbf16>
    %cst_87 = arith.constant 0.000000e+00 : f32
    %226 = arith.truncf %cst_87 : f32 to bf16
    %227 = vector.shape_cast %63 : vector<1x256xi1> to vector<1x256xi1>
    %228 = vector.broadcast %227 : vector<1x256xi1> to vector<16x256xi1>
    %229 = vector.broadcast %226 : bf16 to vector<16x256xbf16>
    %230 = arith.select %228, %225, %229 : vector<16x256xi1>, vector<16x256xbf16>
    %c0_88 = arith.constant 0 : index
    %c127_89 = arith.constant 127 : index
    %231 = vector.load %arg8[%c0_88, %c127_89] : memref<16x512xbf16, #tpu.memory_space<vmem>>, vector<16x256xbf16>
    %cst_90 = arith.constant 0.000000e+00 : f32
    %232 = arith.truncf %cst_90 : f32 to bf16
    %233 = vector.shape_cast %82 : vector<1x256xi1> to vector<1x256xi1>
    %234 = vector.broadcast %233 : vector<1x256xi1> to vector<16x256xi1>
    %235 = vector.broadcast %232 : bf16 to vector<16x256xbf16>
    %236 = arith.select %234, %231, %235 : vector<16x256xi1>, vector<16x256xbf16>
    %c0_91 = arith.constant 0 : index
    %c128_92 = arith.constant 128 : index
    %237 = vector.load %arg8[%c0_91, %c128_92] : memref<16x512xbf16, #tpu.memory_space<vmem>>, vector<16x256xbf16>
    %c0_93 = arith.constant 0 : index
    %c129_94 = arith.constant 129 : index
    %238 = vector.load %arg8[%c0_93, %c129_94] : memref<16x512xbf16, #tpu.memory_space<vmem>>, vector<16x256xbf16>
    %cst_95 = arith.constant 0.000000e+00 : f32
    %239 = arith.truncf %cst_95 : f32 to bf16
    %240 = vector.shape_cast %101 : vector<1x256xi1> to vector<1x256xi1>
    %241 = vector.broadcast %240 : vector<1x256xi1> to vector<16x256xi1>
    %242 = vector.broadcast %239 : bf16 to vector<16x256xbf16>
    %243 = arith.select %241, %238, %242 : vector<16x256xi1>, vector<16x256xbf16>
    %c0_96 = arith.constant 0 : index
    %c143_97 = arith.constant 143 : index
    %244 = vector.load %arg8[%c0_96, %c143_97] : memref<16x512xbf16, #tpu.memory_space<vmem>>, vector<16x256xbf16>
    %cst_98 = arith.constant 0.000000e+00 : f32
    %245 = arith.truncf %cst_98 : f32 to bf16
    %246 = vector.shape_cast %120 : vector<1x256xi1> to vector<1x256xi1>
    %247 = vector.broadcast %246 : vector<1x256xi1> to vector<16x256xi1>
    %248 = vector.broadcast %245 : bf16 to vector<16x256xbf16>
    %249 = arith.select %247, %244, %248 : vector<16x256xi1>, vector<16x256xbf16>
    %c0_99 = arith.constant 0 : index
    %c144_100 = arith.constant 144 : index
    %250 = vector.load %arg8[%c0_99, %c144_100] : memref<16x512xbf16, #tpu.memory_space<vmem>>, vector<16x256xbf16>
    %cst_101 = arith.constant 0.000000e+00 : f32
    %251 = arith.truncf %cst_101 : f32 to bf16
    %252 = vector.shape_cast %129 : vector<1x256xi1> to vector<1x256xi1>
    %253 = vector.broadcast %252 : vector<1x256xi1> to vector<16x256xi1>
    %254 = vector.broadcast %251 : bf16 to vector<16x256xbf16>
    %255 = arith.select %253, %250, %254 : vector<16x256xi1>, vector<16x256xbf16>
    %c0_102 = arith.constant 0 : index
    %c145_103 = arith.constant 145 : index
    %256 = vector.load %arg8[%c0_102, %c145_103] : memref<16x512xbf16, #tpu.memory_space<vmem>>, vector<16x256xbf16>
    %cst_104 = arith.constant 0.000000e+00 : f32
    %257 = arith.truncf %cst_104 : f32 to bf16
    %258 = vector.shape_cast %148 : vector<1x256xi1> to vector<1x256xi1>
    %259 = vector.broadcast %258 : vector<1x256xi1> to vector<16x256xi1>
    %260 = vector.broadcast %257 : bf16 to vector<16x256xbf16>
    %261 = arith.select %259, %256, %260 : vector<16x256xi1>, vector<16x256xbf16>
    %262 = tpu.concatenate %218, %224, %230, %236, %237, %243, %249, %255, %261 in 0 : vector<16x256xbf16>, vector<16x256xbf16>, vector<16x256xbf16>, vector<16x256xbf16>, vector<16x256xbf16>, vector<16x256xbf16>, vector<16x256xbf16>, vector<16x256xbf16>, vector<16x256xbf16> -> vector<144x256xbf16>
    %c0_105 = arith.constant 0 : index
    %c0_106 = arith.constant 0 : index
    %263 = vector.load %arg3[%c0_105, %c0_106] : memref<16x144xbf16, #tpu.memory_space<vmem>>, vector<16x144xbf16>
    %cst_107 = arith.constant dense<0.000000e+00> : vector<16x256xf32>
    %264 = tpu.matmul %263, %262, %cst_107 {dimension_numbers = #tpu.dot_dimension_numbers<[1], [0], [0], [1], [0, 0, 1, 1], [], []>} : vector<16x144xbf16>, vector<144x256xbf16>, vector<16x256xf32> -> vector<16x256xf32>
    %cst_108 = arith.constant dense<0.000000e+00> : vector<16xf32>
    %265 = vector.multi_reduction <add>, %264, %cst_108 [1] : vector<16x256xf32> to vector<16xf32>
    %266 = vector.shape_cast %265 : vector<16xf32> to vector<16x1xf32>
    %cst_109 = arith.constant 2.560000e+02 : f32
    %267 = vector.broadcast %cst_109 : f32 to vector<16x1xf32>
    %268 = arith.divf %266, %267 : vector<16x1xf32>
    %269 = vector.shape_cast %268 : vector<16x1xf32> to vector<16x1xf32>
    %270 = vector.broadcast %269 : vector<16x1xf32> to vector<16x128xf32>
    %c0_110 = arith.constant 0 : index
    %c0_111 = arith.constant 0 : index
    %271 = vector.load %arg4[%c0_110, %c0_111] : memref<16x16xf32, #tpu.memory_space<vmem>>, vector<16x16xf32>
    %cst_112 = arith.constant dense<0.000000e+00> : vector<16x128xf32>
    %272 = tpu.matmul %271, %270, %cst_112 {dimension_numbers = #tpu.dot_dimension_numbers<[1], [0], [0], [1], [0, 0, 1, 1], [], []>} : vector<16x16xf32>, vector<16x128xf32>, vector<16x128xf32> -> vector<16x128xf32>
    %273 = vector.extract_strided_slice %272 {offsets = [0, 0], sizes = [16, 1], strides = [1, 1]} : vector<16x128xf32> to vector<16x1xf32>
    %c0_113 = arith.constant 0 : index
    %274 = memref.load %arg5[%c0_113] : memref<1xf32, #tpu.memory_space<smem>>
    %275 = vector.broadcast %274 : f32 to vector<16x1xf32>
    %276 = arith.addf %273, %275 : vector<16x1xf32>
    %277 = arith.negf %276 : vector<16x1xf32>
    %278 = math.exp %277 : vector<16x1xf32>
    %cst_114 = arith.constant 1.000000e+00 : f32
    %279 = vector.broadcast %cst_114 : f32 to vector<16x1xf32>
    %280 = arith.addf %279, %278 : vector<16x1xf32>
    %281 = arith.divf %279, %280 : vector<16x1xf32>
    %282 = vector.broadcast %281 : vector<16x1xf32> to vector<16x256xf32>
    %283 = arith.mulf %264, %282 : vector<16x256xf32>
    %c0_115 = arith.constant 0 : index
    %c0_116 = arith.constant 0 : index
    %c0_117 = arith.constant 0 : index
    %284 = vector.load %arg1[%c0_115, %c0_116, %c0_117] : memref<1x16x256xf32, #tpu.memory_space<vmem>>, vector<1x16x256xf32>
    %285 = vector.shape_cast %284 : vector<1x16x256xf32> to vector<16x256xf32>
    %286 = arith.addf %283, %285 : vector<16x256xf32>
    %c0_118 = arith.constant 0 : index
    %c0_119 = arith.constant 0 : index
    %c0_120 = arith.constant 0 : index
    %287 = vector.load %arg7[%c0_118, %c0_119, %c0_120] : memref<1x16x256xf32, #tpu.memory_space<vmem>>, vector<1x16x256xf32>
    %288 = vector.shape_cast %287 : vector<1x16x256xf32> to vector<16x256xf32>
    %289 = vector.shape_cast %286 : vector<16x256xf32> to vector<1x16x256xf32>
    tpu.vector_store %arg7[%c0_118, %c0_119, %c0_120], %289 {strides = array<i32>} : memref<1x16x256xf32, #tpu.memory_space<vmem>>, vector<1x16x256xf32>,
    return
  }
  func.func @transform_0(%arg0: i32) -> (i32, i32, i32) {
    %c0_i32 = arith.constant 0 : i32
    %c0_i32_0 = arith.constant 0 : i32
    %c0_i32_1 = arith.constant 0 : i32
    return %arg0, %c0_i32, %c0_i32_0 : i32, i32, i32
  }
  func.func @transform_1(%arg0: i32) -> (i32, i32) {
    %c0_i32 = arith.constant 0 : i32
    %c0_i32_0 = arith.constant 0 : i32
    %c0_i32_1 = arith.constant 0 : i32
    return %c0_i32, %c0_i32_0 : i32, i32
  }
  func.func @transform_2(%arg0: i32) -> (i32, i32) {
    %c0_i32 = arith.constant 0 : i32
    %c0_i32_0 = arith.constant 0 : i32
    %c0_i32_1 = arith.constant 0 : i32
    return %c0_i32, %c0_i32_0 : i32, i32
  }
  func.func @transform_3(%arg0: i32) -> (i32, i32) {
    %c0_i32 = arith.constant 0 : i32
    %c0_i32_0 = arith.constant 0 : i32
    %c0_i32_1 = arith.constant 0 : i32
    return %c0_i32, %c0_i32_0 : i32, i32
  }
  func.func @transform_4(%arg0: i32) -> i32 {
    %c0_i32 = arith.constant 0 : i32
    %c0_i32_0 = arith.constant 0 : i32
    return %c0_i32 : i32
  }
  func.func @transform_5(%arg0: i32) -> i32 {
    %c0_i32 = arith.constant 0 : i32
    %c0_i32_0 = arith.constant 0 : i32
    return %c0_i32 : i32
  }
  func.func @transform_6(%arg0: i32) -> (i32, i32, i32) {
    %c0_i32 = arith.constant 0 : i32
    %c0_i32_0 = arith.constant 0 : i32
    %c0_i32_1 = arith.constant 0 : i32
    return %arg0, %c0_i32, %c0_i32_0 : i32, i32, i32
  }
}

</mosaic_0001>

<llo_original>
// kernel: tpu_custom_call.1
$region0: #{tpu_custom_call.1}
  #allocation0 [shape = 'u32[]', space=smem, size = 0x4, offset = 0x4, fixed_abs, tag = 'smem constant byte address 0x4 - core index']
  #allocation1 [shape = 'u32[72,128]{1,0:T(1,128)}', space=vmem, size = 0x9000, scoped, tag = 'internal scratch']
  #allocation2 [shape = 'bf16[16,512]{1,0:T(8,128)(2,1)}', space=vmem, size = 0x4000, scoped, tag = 'scratch operand']
  #allocation3 [shape = 'f32[1]{0:T(128)S(6)}', space=smem, size = 0x200, scoped, tag = 'scoped memory for tpu_custom_call.1']
  #allocation4 [shape = 'f32[1]{0:T(128)S(6)}', space=smem, size = 0x200, scoped, tag = 'scoped memory for tpu_custom_call.1']
  %s0 = inlined_call_operand.hbm [shape: f32[8,16,256], index: 0, kind: input, shape index: {}]
  %s1 = inlined_call_operand.hbm [shape: bf16[16,144], index: 1, kind: input, shape index: {}]
  %s2 = inlined_call_operand.hbm [shape: bf16[16,144], index: 2, kind: input, shape index: {}]
  %s3 = inlined_call_operand.hbm [shape: f32[16,16], index: 3, kind: input, shape index: {}]
  %s4 = inlined_call_operand.<no memory space> [shape: f32[1], index: 4, kind: input, shape index: {}]
  %s5 = inlined_call_operand.<no memory space> [shape: f32[1], index: 5, kind: input, shape index: {}]
  %s6 = inlined_call_operand.hbm [shape: f32[8,16,256], index: 6, kind: output, shape index: {}]
  %s7 = sld [smem:[#allocation0]]
  $region73: #{tpu_custom_call.1} parent=0
    _
  %s9 = ssub.s32 1, %s7
  %s10 = scalar_select 0, %s9, %s7
  %11 = sst [smem:[#allocation3]] %s4
  %12 = sst [smem:[#allocation4]] %s5
  $region1: #{tpu_custom_call.1} parent=0
    #allocation5 [shape = 'u8[32768]{0}', space=vmem, size = 0x8000, scoped, tag = 'input window, operand 0']
    #allocation6 [shape = 's32[2]{0}', space=sflag, size = 0x8, scoped, tag = 'scoped memory for tpu_custom_call.1']
    #allocation7 [shape = 's32[2]{0}', space=sflag, size = 0x8, scoped, tag = 'scoped memory for tpu_custom_call.1']
    #allocation8 [shape = 'u8[8192]{0}', space=vmem, size = 0x2000, scoped, tag = 'input window, operand 1, single buffered']
    #allocation9 [shape = 's32[1]{0}', space=sflag, size = 0x4, scoped, tag = 'scoped memory for tpu_custom_call.1']
    #allocation10 [shape = 'u8[8192]{0}', space=vmem, size = 0x2000, scoped, tag = 'input window, operand 2, single buffered']
    #allocation11 [shape = 'u8[8192]{0}', space=vmem, size = 0x2000, scoped, tag = 'input window, operand 3, single buffered']
    #allocation12 [shape = 's32[1]{0}', space=sflag, size = 0x4, scoped, tag = 'scoped memory for tpu_custom_call.1']
    #allocation13 [shape = 'u8[32768]{0}', space=vmem, size = 0x8000, scoped, tag = 'output window, operand 0']
    %13 = vsyncpa [#allocation6], 0
    %s14 = scalar_lea.sflag [#allocation6], 1
    %15 = vsyncpa %s14, 0
    %16 = vsyncpa [#allocation9], 0
    %17 = vsyncpa [#allocation12], 0
    %18 = vsyncpa [#allocation7], 0
    %s19 = scalar_lea.sflag [#allocation7], 1
    %20 = vsyncpa %s19, 0
    loop: start=0, step=1, limit=10
    $region2: #{tpu_custom_call.1} parent=1 // loop_pre_header
      _
    $region3: #{tpu_custom_call.1} parent=1 // loop_header
      %s22 = sphi 0, %s26
      %p23 = scmp.ge.s32.totalorder %s22, 10
      %s32 = sphi 0, %s34
      %s35 = sphi 0, %s32
      %s36 = sphi 0, %s35
      %s52 = sphi 0, %s36
      %s56 = sphi 0, %s56
      %s58 = sphi 0, %s56
      %s59 = sphi 0, %s58
      %s73 = sphi 0, %s59
      %s77 = sphi 0, %s77
      %s79 = sphi 0, %s77
      %s80 = sphi 0, %s79
      %s94 = sphi 0, %s80
      %s98 = sphi 0, %s98
      %s100 = sphi 0, %s98
      %s101 = sphi 0, %s100
      %s115 = sphi 0, %s101
      %s119 = sphi 0, %s119
      %s121 = sphi 0, %s119
      %s122 = sphi 0, %s121
      %s136 = sphi 0, %s122
      %s140 = sphi 0, %s140
      %s142 = sphi 0, %s140
      %s143 = sphi 0, %s142
      %s157 = sphi 0, %s143
      %s163 = sphi 0, %s165
      %s166 = sphi 0, %s163
      %s167 = sphi 0, %s166
      %s183 = sphi 0, %s167
    $region4: #{tpu_custom_call.1} parent=1 // loop_header_branch
      %25 = sbr.rel (%p23) target = $region8
    $region5: #{tpu_custom_call.1} parent=1 // loop_body
      %s27 = ssub.s32 %s22, 1
      %s28 = ssub.s32 %s22, 2
      %s29 = sadd.s32 %s22, 1
      %s30 = ssub.s32 %s22, %s29
      %p31 = scmp.eq.s32.totalorder %s30, 0
      %s33 = sadd.s32 %s32, 1
      %s34 = scalar_select %p31, %s32, %s33
      %p37 = pneg %p31
      %p38 = scmp.eq.s32.totalorder %s22, 7
      %p39 = por %p37, %p38
      %p40 = scmp.ne.s32.totalorder %s32, %s35
      %p41 = scmp.eq.s32.totalorder %s22, 0
      %p42 = por %p40, %p41
      %p43 = scmp.ne.s32.totalorder %s32, %s35
      %p44 = scmp.eq.s32.totalorder %s27, 7
      %p45 = por %p43, %p44
      %p46 = scmp.ne.s32.totalorder %s35, %s36
      %p47 = scmp.eq.s32.totalorder %s27, 0
      %p48 = por %p46, %p47
      %p49 = scmp.ne.s32.totalorder %s35, %s36
      %p50 = scmp.eq.s32.totalorder %s28, 7
      %p51 = por %p49, %p50
      %p53 = scmp.ne.s32.totalorder %s36, %s52
      %p54 = scmp.eq.s32.totalorder %s28, 0
      %p55 = por %p53, %p54
      %s57 = sadd.s32 %s56, 1
      %p60 = scmp.eq.s32.totalorder %s22, 7
      %p61 = scmp.ne.s32.totalorder %s56, %s58
      %p62 = scmp.eq.s32.totalorder %s22, 0
      %p63 = por %p61, %p62
      %p64 = scmp.ne.s32.totalorder %s56, %s58
      %p65 = scmp.eq.s32.totalorder %s27, 7
      %p66 = por %p64, %p65
      %p67 = scmp.ne.s32.totalorder %s58, %s59
      %p68 = scmp.eq.s32.totalorder %s27, 0
      %p69 = por %p67, %p68
      %p70 = scmp.ne.s32.totalorder %s58, %s59
      %p71 = scmp.eq.s32.totalorder %s28, 7
      %p72 = por %p70, %p71
      %p74 = scmp.ne.s32.totalorder %s59, %s73
      %p75 = scmp.eq.s32.totalorder %s28, 0
      %p76 = por %p74, %p75
      %s78 = sadd.s32 %s77, 1
      %p81 = scmp.eq.s32.totalorder %s22, 7
      %p82 = scmp.ne.s32.totalorder %s77, %s79
      %p83 = scmp.eq.s32.totalorder %s22, 0
      %p84 = por %p82, %p83
      %p85 = scmp.ne.s32.totalorder %s77, %s79
      %p86 = scmp.eq.s32.totalorder %s27, 7
      %p87 = por %p85, %p86
      %p88 = scmp.ne.s32.totalorder %s79, %s80
      %p89 = scmp.eq.s32.totalorder %s27, 0
      %p90 = por %p88, %p89
      %p91 = scmp.ne.s32.totalorder %s79, %s80
      %p92 = scmp.eq.s32.totalorder %s28, 7
      %p93 = por %p91, %p92
      %p95 = scmp.ne.s32.totalorder %s80, %s94
      %p96 = scmp.eq.s32.totalorder %s28, 0
      %p97 = por %p95, %p96
      %s99 = sadd.s32 %s98, 1
      %p102 = scmp.eq.s32.totalorder %s22, 7
      %p103 = scmp.ne.s32.totalorder %s98, %s100
      %p104 = scmp.eq.s32.totalorder %s22, 0
      %p105 = por %p103, %p104
      %p106 = scmp.ne.s32.totalorder %s98, %s100
      %p107 = scmp.eq.s32.totalorder %s27, 7
      %p108 = por %p106, %p107
      %p109 = scmp.ne.s32.totalorder %s100, %s101
      %p110 = scmp.eq.s32.totalorder %s27, 0
      %p111 = por %p109, %p110
      %p112 = scmp.ne.s32.totalorder %s100, %s101
      %p113 = scmp.eq.s32.totalorder %s28, 7
      %p114 = por %p112, %p113
      %p116 = scmp.ne.s32.totalorder %s101, %s115
      %p117 = scmp.eq.s32.totalorder %s28, 0
      %p118 = por %p116, %p117
      %s120 = sadd.s32 %s119, 1
      %p123 = scmp.eq.s32.totalorder %s22, 7
      %p124 = scmp.ne.s32.totalorder %s119, %s121
      %p125 = scmp.eq.s32.totalorder %s22, 0
      %p126 = por %p124, %p125
      %p127 = scmp.ne.s32.totalorder %s119, %s121
      %p128 = scmp.eq.s32.totalorder %s27, 7
      %p129 = por %p127, %p128
      %p130 = scmp.ne.s32.totalorder %s121, %s122
      %p131 = scmp.eq.s32.totalorder %s27, 0
      %p132 = por %p130, %p131
      %p133 = scmp.ne.s32.totalorder %s121, %s122
      %p134 = scmp.eq.s32.totalorder %s28, 7
      %p135 = por %p133, %p134
      %p137 = scmp.ne.s32.totalorder %s122, %s136
      %p138 = scmp.eq.s32.totalorder %s28, 0
      %p139 = por %p137, %p138
      %s141 = sadd.s32 %s140, 1
      %p144 = scmp.eq.s32.totalorder %s22, 7
      %p145 = scmp.ne.s32.totalorder %s140, %s142
      %p146 = scmp.eq.s32.totalorder %s22, 0
      %p147 = por %p145, %p146
      %p148 = scmp.ne.s32.totalorder %s140, %s142
      %p149 = scmp.eq.s32.totalorder %s27, 7
      %p150 = por %p148, %p149
      %p151 = scmp.ne.s32.totalorder %s142, %s143
      %p152 = scmp.eq.s32.totalorder %s27, 0
      %p153 = por %p151, %p152
      %p154 = scmp.ne.s32.totalorder %s142, %s143
      %p155 = scmp.eq.s32.totalorder %s28, 7
      %p156 = por %p154, %p155
      %p158 = scmp.ne.s32.totalorder %s143, %s157
      %p159 = scmp.eq.s32.totalorder %s28, 0
      %p160 = por %p158, %p159
      %s161 = ssub.s32 %s22, %s29
      %p162 = scmp.eq.s32.totalorder %s161, 0
      %s164 = sadd.s32 %s163, 1
      %s165 = scalar_select %p162, %s163, %s164
      %p168 = pneg %p162
      %p169 = scmp.eq.s32.totalorder %s22, 7
      %p170 = por %p168, %p169
      %p171 = scmp.ne.s32.totalorder %s163, %s166
      %p172 = scmp.eq.s32.totalorder %s22, 0
      %p173 = por %p171, %p172
      %p174 = scmp.ne.s32.totalorder %s163, %s166
      %p175 = scmp.eq.s32.totalorder %s27, 7
      %p176 = por %p174, %p175
      %p177 = scmp.ne.s32.totalorder %s166, %s167
      %p178 = scmp.eq.s32.totalorder %s27, 0
      %p179 = por %p177, %p178
      %p180 = scmp.ne.s32.totalorder %s166, %s167
      %p181 = scmp.eq.s32.totalorder %s28, 7
      %p182 = por %p180, %p181
      %p184 = scmp.ne.s32.totalorder %s167, %s183
      %p185 = scmp.eq.s32.totalorder %s28, 0
      %p186 = por %p184, %p185
      %p187 = scmp.le.s32.totalorder 1, %s22
      %p188 = scmp.lt.s32.totalorder %s22, 9
      %p189 = pnand %p187, %p188
      %p190 = pneg %p189
      // Predicated region
      $region9: #{tpu_custom_call.1} parent=5 // pred_check
        _
      $region10: #{tpu_custom_call.1} parent=5 // pred_check_branch
        %192 = sbr.rel (%p189) target = $region12
      $region11: #{tpu_custom_call.1} parent=5 // pred_region
        %s193 = ssub.s32 %s22, 1
        // Predicated region
        $region13: #{tpu_custom_call.1} parent=11 // pred_check
          %p194 = pneg %p69
        $region14: #{tpu_custom_call.1} parent=11 // pred_check_branch
          %196 = sbr.rel (%p194) target = $region16
        $region15: #{tpu_custom_call.1} parent=11 // pred_region
          %198 = vsyncadd [#allocation9], 0
          %s199 = sshll.u32 %s1, 4
          %s200 = int_to_ptr.hbm [resolvable:$true] %s199
          %s201 = sshll.u32 [#allocation8], 4
          %s202 = int_to_ptr.vmem [resolvable:$true] %s201
          %207 = dma.hbm_to_vmem [thread:$0]  %s200, 256, %s202, [#allocation9], 128, 128, 8
        $region16: #{tpu_custom_call.1} parent=11 // pred_fallthru
          _
        // Predicated region
        $region17: #{tpu_custom_call.1} parent=11 // pred_check
          %p208 = pneg %p90
        $region18: #{tpu_custom_call.1} parent=11 // pred_check_branch
          %210 = sbr.rel (%p208) target = $region20
        $region19: #{tpu_custom_call.1} parent=11 // pred_region
          %212 = vsyncadd [#allocation9], 0
          %s213 = sshll.u32 %s2, 4
          %s214 = int_to_ptr.hbm [resolvable:$true] %s213
          %s215 = sshll.u32 [#allocation10], 4
          %s216 = int_to_ptr.vmem [resolvable:$true] %s215
          %221 = dma.hbm_to_vmem [thread:$0]  %s214, 256, %s216, [#allocation9], 128, 128, 8
        $region20: #{tpu_custom_call.1} parent=11 // pred_fallthru
          _
        // Predicated region
        $region21: #{tpu_custom_call.1} parent=11 // pred_check
          %p222 = pneg %p111
        $region22: #{tpu_custom_call.1} parent=11 // pred_check_branch
          %224 = sbr.rel (%p222) target = $region24
        $region23: #{tpu_custom_call.1} parent=11 // pred_region
          %226 = vsyncadd [#allocation12], 0
          %s227 = sshll.u32 %s3, 4
          %s228 = int_to_ptr.hbm [resolvable:$true] %s227
          %s229 = sshll.u32 [#allocation11], 4
          %s230 = int_to_ptr.vmem [resolvable:$true] %s229
          %235 = dma.hbm_to_vmem [thread:$0]  %s228, 256, %s230, [#allocation12], 128, 128, 8
        $region24: #{tpu_custom_call.1} parent=11 // pred_fallthru
          _
        // Predicated region
        $region25: #{tpu_custom_call.1} parent=11 // pred_check
          %p236 = pneg %p132
        $region26: #{tpu_custom_call.1} parent=11 // pred_check_branch
          %238 = sbr.rel (%p236) target = $region28
        $region27: #{tpu_custom_call.1} parent=11 // pred_region
          _
        $region28: #{tpu_custom_call.1} parent=11 // pred_fallthru
          _
        // Predicated region
        $region29: #{tpu_custom_call.1} parent=11 // pred_check
          %p239 = pneg %p153
        $region30: #{tpu_custom_call.1} parent=11 // pred_check_branch
          %241 = sbr.rel (%p239) target = $region32
        $region31: #{tpu_custom_call.1} parent=11 // pred_region
          _
        $region32: #{tpu_custom_call.1} parent=11 // pred_fallthru
          _
      $region12: #{tpu_custom_call.1} parent=5 // pred_fallthru
        _
      %p242 = scmp.lt.s32.totalorder %s22, 8
      // Predicated region
      $region33: #{tpu_custom_call.1} parent=5 // pred_check
        %p243 = pneg %p242
      $region34: #{tpu_custom_call.1} parent=5 // pred_check_branch
        %245 = sbr.rel (%p243) target = $region36
      $region35: #{tpu_custom_call.1} parent=5 // pred_region
        // Predicated region
        $region37: #{tpu_custom_call.1} parent=35 // pred_check
          %p246 = pneg %p42
        $region38: #{tpu_custom_call.1} parent=35 // pred_check_branch
          %248 = sbr.rel (%p246) target = $region40
        $region39: #{tpu_custom_call.1} parent=35 // pred_region
          %s249 = sand.u32 %s32, 1
          %s250 = scalar_lea.sflag [#allocation6], %s249
          %s251 = sand.u32 %s32, 1
          %s252 = smul.addr %s251, 32
          %s253 = scalar_lea.vmem [#allocation5], %s252
          %255 = vsyncadd %s250, 0
          %s256 = smul.addr %s22, 4
          %s257 = smul.addr %s256, 8
          %s258 = scalar_lea.hbm %s0, %s257
          %s259 = sshll.u32 %s258, 4
          %s260 = int_to_ptr.hbm [resolvable:$true] %s259
          %s261 = sshll.u32 %s253, 4
          %s262 = int_to_ptr.vmem [resolvable:$true] %s261
          %267 = dma.hbm_to_vmem [thread:$0]  %s260, 512, %s262, %s250, 256, 256, 16
        $region40: #{tpu_custom_call.1} parent=35 // pred_fallthru
          _
      $region36: #{tpu_custom_call.1} parent=5 // pred_fallthru
        _
      %p268 = scmp.le.s32.totalorder 1, %s22
      %p269 = scmp.lt.s32.totalorder %s22, 9
      %p270 = pnand %p268, %p269
      %p271 = pneg %p270
      // Predicated region
      $region41: #{tpu_custom_call.1} parent=5 // pred_check
        _
      $region42: #{tpu_custom_call.1} parent=5 // pred_check_branch
        %273 = sbr.rel (%p270) target = $region44
      $region43: #{tpu_custom_call.1} parent=5 // pred_region
        %s274 = ssub.s32 %s22, 1
        %s275 = sand.u32 %s35, 1
        %s276 = scalar_lea.sflag [#allocation6], %s275
        %s277 = sand.u32 %s35, 1
        %s278 = smul.addr %s277, 32
        %s279 = scalar_lea.vmem [#allocation5], %s278
        // Predicated region
        $region45: #{tpu_custom_call.1} parent=43 // pred_check
          %p280 = pneg %p48
        $region46: #{tpu_custom_call.1} parent=43 // pred_check_branch
          %282 = sbr.rel (%p280) target = $region48
        $region47: #{tpu_custom_call.1} parent=43 // pred_region
          %284 = dma.done %s276, 512
        $region48: #{tpu_custom_call.1} parent=43 // pred_fallthru
          _
        // Predicated region
        $region49: #{tpu_custom_call.1} parent=43 // pred_check
          %p285 = pneg %p69
        $region50: #{tpu_custom_call.1} parent=43 // pred_check_branch
          %287 = sbr.rel (%p285) target = $region52
        $region51: #{tpu_custom_call.1} parent=43 // pred_region
          %289 = dma.done [#allocation9], 256
        $region52: #{tpu_custom_call.1} parent=43 // pred_fallthru
          _
        // Predicated region
        $region53: #{tpu_custom_call.1} parent=43 // pred_check
          %p290 = pneg %p90
        $region54: #{tpu_custom_call.1} parent=43 // pred_check_branch
          %292 = sbr.rel (%p290) target = $region56
        $region55: #{tpu_custom_call.1} parent=43 // pred_region
          %294 = dma.done [#allocation9], 256
        $region56: #{tpu_custom_call.1} parent=43 // pred_fallthru
          _
        // Predicated region
        $region57: #{tpu_custom_call.1} parent=43 // pred_check
          %p295 = pneg %p111
        $region58: #{tpu_custom_call.1} parent=43 // pred_check_branch
          %297 = sbr.rel (%p295) target = $region60
        $region59: #{tpu_custom_call.1} parent=43 // pred_region
          %299 = dma.done [#allocation12], 256
        $region60: #{tpu_custom_call.1} parent=43 // pred_fallthru
          _
        %s300 = sand.u32 %s35, 1
        %s301 = scalar_lea.sflag [#allocation6], %s300
        %s302 = sand.u32 %s35, 1
        %s303 = smul.addr %s302, 32
        %s304 = scalar_lea.vmem [#allocation5], %s303
        %p305 = pneg %p48
        %p306 = pneg %p45
        %p307 = pneg %p69
        %p308 = pneg %p66
        %p309 = pneg %p90
        %p310 = pneg %p87
        %p311 = pneg %p111
        %p312 = pneg %p108
        %p313 = pneg %p132
        %p314 = pneg %p129
        %p315 = pneg %p153
        %p316 = pneg %p150
        %p317 = pneg %p179
        %p318 = pneg %p176
        %s319 = sand.u32 %s166, 1
        %s320 = scalar_lea.sflag [#allocation7], %s319
        %s321 = sand.u32 %s166, 1
        %s322 = smul.addr %s321, 32
        %s323 = scalar_lea.vmem [#allocation13], %s322
        %v327 = vlaneseq
        %v328 = vand.u32 %v327, 127
        %v329 = vadd.s32 %v328, 128
        %vm330 = vcmp.lt.s32.totalorder %v328, 0
        %v331 = vsub.s32 0, %v328
        %v332 = vsel %vm330, %v331, %v328
        %v333 = vshrl.u32 %v332, 4
        %v334 = vand.u32 %v332, 15
        %v335 = vsub.s32 0, %v334
        %v336 = vsel %vm330, %v335, %v334
        %vm337 = vcmp.lt.s32.totalorder %v329, 0
        %v338 = vsub.s32 0, %v329
        %v339 = vsel %vm337, %v338, %v329
        %v340 = vshrl.u32 %v339, 4
        %v341 = vand.u32 %v339, 15
        %v342 = vsub.s32 0, %v341
        %v343 = vsel %vm337, %v342, %v341
        %vm344 = vcmp.ne.s32.totalorder %v336, 0
        %vm345 = vcmp.ne.s32.totalorder %v343, 0
        %vm346 = vcmp.lt.s32.totalorder %v336, 0
        %vm347 = vcmp.lt.s32.totalorder %v343, 0
        %vm348 = vmand %vm346, %vm344
        %vm349 = vmand %vm347, %vm345
        %v350 = vadd.s32 %v336, 16
        %v351 = vadd.s32 %v343, 16
        %v352 = vsel %vm348, %v350, %v336
        %v353 = vsel %vm349, %v351, %v343
        %v354 = vadd.s32 %v328, 4294967279
        %v355 = vadd.s32 %v329, 4294967279
        %vm356 = vcmp.ge.s32.totalorder %v354, 0
        %vm357 = vcmp.ge.s32.totalorder %v355, 0
        %vm358 = vcmp.lt.s32.totalorder %v354, 256
        %vm359 = vcmp.lt.s32.totalorder %v355, 256
        %vm360 = vmand %vm356, %vm358
        %vm361 = vmand %vm357, %vm359
        %v362 = vadd.s32 %v352, 4294967295
        %v363 = vadd.s32 %v353, 4294967295
        %vm364 = vcmp.ge.s32.totalorder %v362, 0
        %vm365 = vcmp.ge.s32.totalorder %v363, 0
        %vm366 = vmand %vm360, %vm364
        %vm367 = vmand %vm361, %vm365
        %vm368 = vcmp.lt.s32.totalorder %v362, 16
        %vm369 = vcmp.lt.s32.totalorder %v363, 16
        %vm370 = vmand %vm366, %vm368
        %vm371 = vmand %vm367, %vm369
        %v372 = vadd.s32 %v328, 4294967280
        %v373 = vadd.s32 %v329, 4294967280
        %vm374 = vcmp.ge.s32.totalorder %v372, 0
        %vm375 = vcmp.ge.s32.totalorder %v373, 0
        %vm376 = vcmp.lt.s32.totalorder %v372, 256
        %vm377 = vcmp.lt.s32.totalorder %v373, 256
        %vm378 = vmand %vm374, %vm376
        %vm379 = vmand %vm375, %vm377
        %v380 = vadd.s32 %v328, 4294967281
        %v381 = vadd.s32 %v329, 4294967281
        %vm382 = vcmp.ge.s32.totalorder %v380, 0
        %vm383 = vcmp.ge.s32.totalorder %v381, 0
        %vm384 = vcmp.lt.s32.totalorder %v380, 256
        %vm385 = vcmp.lt.s32.totalorder %v381, 256
        %vm386 = vmand %vm382, %vm384
        %vm387 = vmand %vm383, %vm385
        %v388 = vadd.s32 %v352, 1
        %v389 = vadd.s32 %v353, 1
        %vm390 = vcmp.ge.s32.totalorder %v388, 0
        %vm391 = vcmp.ge.s32.totalorder %v389, 0
        %vm392 = vmand %vm386, %vm390
        %vm393 = vmand %vm387, %vm391
        %vm394 = vcmp.lt.s32.totalorder %v388, 16
        %vm395 = vcmp.lt.s32.totalorder %v389, 16
        %vm396 = vmand %vm392, %vm394
        %vm397 = vmand %vm393, %vm395
        %v398 = vadd.s32 %v328, 4294967295
        %v399 = vadd.s32 %v329, 4294967295
        %vm400 = vcmp.ge.s32.totalorder %v398, 0
        %vm401 = vcmp.ge.s32.totalorder %v399, 0
        %vm402 = vcmp.lt.s32.totalorder %v398, 256
        %vm403 = vcmp.lt.s32.totalorder %v399, 256
        %vm404 = vmand %vm400, %vm402
        %vm405 = vmand %vm401, %vm403
        %vm406 = vmand %vm404, %vm364
        %vm407 = vmand %vm405, %vm365
        %vm408 = vmand %vm406, %vm368
        %vm409 = vmand %vm407, %vm369
        %v410 = vadd.s32 %v328, 1
        %v411 = vadd.s32 %v329, 1
        %vm412 = vcmp.ge.s32.totalorder %v410, 0
        %vm413 = vcmp.ge.s32.totalorder %v411, 0
        %vm414 = vcmp.lt.s32.totalorder %v410, 256
        %vm415 = vcmp.lt.s32.totalorder %v411, 256
        %vm416 = vmand %vm412, %vm414
        %vm417 = vmand %vm413, %vm415
        %vm418 = vmand %vm416, %vm390
        %vm419 = vmand %vm417, %vm391
        %vm420 = vmand %vm418, %vm394
        %vm421 = vmand %vm419, %vm395
        %v422 = vadd.s32 %v328, 15
        %v423 = vadd.s32 %v329, 15
        %vm424 = vcmp.ge.s32.totalorder %v422, 0
        %vm425 = vcmp.ge.s32.totalorder %v423, 0
        %vm426 = vcmp.lt.s32.totalorder %v422, 256
        %vm427 = vcmp.lt.s32.totalorder %v423, 256
        %vm428 = vmand %vm424, %vm426
        %vm429 = vmand %vm425, %vm427
        %vm430 = vmand %vm428, %vm364
        %vm431 = vmand %vm429, %vm365
        %vm432 = vmand %vm430, %vm368
        %vm433 = vmand %vm431, %vm369
        %v434 = vadd.s32 %v328, 16
        %v435 = vadd.s32 %v329, 16
        %vm436 = vcmp.ge.s32.totalorder %v434, 0
        %vm437 = vcmp.ge.s32.totalorder %v435, 0
        %vm438 = vcmp.lt.s32.totalorder %v434, 256
        %vm439 = vcmp.lt.s32.totalorder %v435, 256
        %vm440 = vmand %vm436, %vm438
        %vm441 = vmand %vm437, %vm439
        %v442 = vadd.s32 %v328, 17
        %v443 = vadd.s32 %v329, 17
        %vm444 = vcmp.ge.s32.totalorder %v442, 0
        %vm445 = vcmp.ge.s32.totalorder %v443, 0
        %vm446 = vcmp.lt.s32.totalorder %v442, 256
        %vm447 = vcmp.lt.s32.totalorder %v443, 256
        %vm448 = vmand %vm444, %vm446
        %vm449 = vmand %vm445, %vm447
        %vm450 = vmand %vm448, %vm390
        %vm451 = vmand %vm449, %vm391
        %vm452 = vmand %vm450, %vm394
        %vm453 = vmand %vm451, %vm395
        %v454 = vld [vmem:[%s279] sm:$0xff]
        %v455 = vld [vmem:[%s279 + $0x8] sm:$0xff]
        %v456 = vld [vmem:[%s279 + $0x10] sm:$0xff]
        %v457 = vld [vmem:[%s279 + $0x18] sm:$0xff]
        %v458 = vpack.c.bf16 %v455, %v454
        %v459 = vpack.c.bf16 %v457, %v456
        %460 = vst [vmem:[#allocation2 + $0x4] sm:$0xff] %v458
        %461 = vst [vmem:[#allocation2 + $0x14] sm:$0xff] %v459
        %v462 = vld [vmem:[#allocation2] sm:$0xff]
        %v463 = vld [vmem:[#allocation2 + $0x8] sm:$0xf]
        %v464 = vld [vmem:[#allocation2 + $0x10] sm:$0xff]
        %v465 = vld [vmem:[#allocation2 + $0x18] sm:$0xf]
        %v466 = vsel %vm370, 1, 0
        %v467 = vsel %vm371, 1, 0
        %vm468 = vcmp.eq.s32.totalorder %v466, 1
        %vm469 = vcmp.eq.s32.totalorder %v467, 1
        %vm470 = vmpackc.low %vm469, %vm468
        %v471 = vsel %vm470, 65537, 0
        %472 = vrot.lane.b32.xlu0 %v471, 111
        %v473 = vpop.permute.xlu0 %472
        %v474 = vrot.slane %v473, 4
        %vm475 = vcmask 908288
        %v476 = vsel %vm475, %v474, %v473
        %v477 = vunpack.c.l.b16 %v476
        %v478 = vunpack.c.h.b16 %v476
        %v479 = vunpack.c.l.b16 0
        %v480 = vunpack.c.h.b16 0
        %vm481 = vcmp.ne.s32.totalorder %v477, %v479
        %vm482 = vcmp.ne.s32.totalorder %v478, %v480
        %vm483 = vmpackc.low %vm482, %vm481
        %v484 = vunpack.c.l.b16 %v474
        %v485 = vunpack.c.h.b16 %v474
        %v486 = vunpack.c.l.b16 0
        %v487 = vunpack.c.h.b16 0
        %vm488 = vcmp.ne.s32.totalorder %v484, %v486
        %vm489 = vcmp.ne.s32.totalorder %v485, %v487
        %vm490 = vmpackc.low %vm489, %vm488
        %v491 = vsel %vm483, %v462, 0
        %v492 = vsel %vm490, %v463, 0
        %v493 = vsel %vm483, %v464, 0
        %v494 = vsel %vm490, %v465, 0
        %v495 = vsel %vm378, 1, 0
        %v496 = vsel %vm379, 1, 0
        %vm497 = vcmp.eq.s32.totalorder %v495, 1
        %vm498 = vcmp.eq.s32.totalorder %v496, 1
        %vm499 = vmpackc.low %vm498, %vm497
        %v500 = vsel %vm499, 65537, 0
        %501 = vrot.lane.b32.xlu0 %v500, 112
        %v502 = vpop.permute.xlu0 %501
        %v503 = vrot.slane %v502, 4
        %vm504 = vcmask 916480
        %v505 = vsel %vm504, %v503, %v502
        %v506 = vunpack.c.l.b16 %v505
        %v507 = vunpack.c.h.b16 %v505
        %v508 = vunpack.c.l.b16 0
        %v509 = vunpack.c.h.b16 0
        %vm510 = vcmp.ne.s32.totalorder %v506, %v508
        %vm511 = vcmp.ne.s32.totalorder %v507, %v509
        %vm512 = vmpackc.low %vm511, %vm510
        %v513 = vunpack.c.l.b16 %v503
        %v514 = vunpack.c.h.b16 %v503
        %v515 = vunpack.c.l.b16 0
        %v516 = vunpack.c.h.b16 0
        %vm517 = vcmp.ne.s32.totalorder %v513, %v515
        %vm518 = vcmp.ne.s32.totalorder %v514, %v516
        %vm519 = vmpackc.low %vm518, %vm517
        %v520 = vsel %vm512, %v462, 0
        %v521 = vsel %vm519, %v463, 0
        %v522 = vsel %vm512, %v464, 0
        %v523 = vsel %vm519, %v465, 0
        %v524 = vsel %vm396, 1, 0
        %v525 = vsel %vm397, 1, 0
        %vm526 = vcmp.eq.s32.totalorder %v524, 1
        %vm527 = vcmp.eq.s32.totalorder %v525, 1
        %vm528 = vmpackc.low %vm527, %vm526
        %v529 = vsel %vm528, 65537, 0
        %530 = vrot.lane.b32.xlu0 %v529, 113
        %v531 = vpop.permute.xlu0 %530
        %v532 = vrot.slane %v531, 4
        %vm533 = vcmask 924672
        %v534 = vsel %vm533, %v532, %v531
        %v535 = vunpack.c.l.b16 %v534
        %v536 = vunpack.c.h.b16 %v534
        %v537 = vunpack.c.l.b16 0
        %v538 = vunpack.c.h.b16 0
        %vm539 = vcmp.ne.s32.totalorder %v535, %v537
        %vm540 = vcmp.ne.s32.totalorder %v536, %v538
        %vm541 = vmpackc.low %vm540, %vm539
        %v542 = vunpack.c.l.b16 %v532
        %v543 = vunpack.c.h.b16 %v532
        %v544 = vunpack.c.l.b16 0
        %v545 = vunpack.c.h.b16 0
        %vm546 = vcmp.ne.s32.totalorder %v542, %v544
        %vm547 = vcmp.ne.s32.totalorder %v543, %v545
        %vm548 = vmpackc.low %vm547, %vm546
        %v549 = vsel %vm541, %v462, 0
        %v550 = vsel %vm548, %v463, 0
        %v551 = vsel %vm541, %v464, 0
        %v552 = vsel %vm548, %v465, 0
        %v553 = vsel %vm408, 1, 0
        %v554 = vsel %vm409, 1, 0
        %vm555 = vcmp.eq.s32.totalorder %v553, 1
        %vm556 = vcmp.eq.s32.totalorder %v554, 1
        %vm557 = vmpackc.low %vm556, %vm555
        %v558 = vsel %vm557, 65537, 0
        %559 = vrot.lane.b32.xlu0 %v558, 127
        %v560 = vpop.permute.xlu0 %559
        %v561 = vrot.slane %v560, 4
        %vm562 = vcmask 1039360
        %v563 = vsel %vm562, %v561, %v560
        %v564 = vunpack.c.l.b16 %v563
        %v565 = vunpack.c.h.b16 %v563
        %v566 = vunpack.c.l.b16 0
        %v567 = vunpack.c.h.b16 0
        %vm568 = vcmp.ne.s32.totalorder %v564, %v566
        %vm569 = vcmp.ne.s32.totalorder %v565, %v567
        %vm570 = vmpackc.low %vm569, %vm568
        %v571 = vunpack.c.l.b16 %v561
        %v572 = vunpack.c.h.b16 %v561
        %v573 = vunpack.c.l.b16 0
        %v574 = vunpack.c.h.b16 0
        %vm575 = vcmp.ne.s32.totalorder %v571, %v573
        %vm576 = vcmp.ne.s32.totalorder %v572, %v574
        %vm577 = vmpackc.low %vm576, %vm575
        %v578 = vsel %vm570, %v462, 0
        %v579 = vsel %vm577, %v463, 0
        %v580 = vsel %vm570, %v464, 0
        %v581 = vsel %vm577, %v465, 0
        %v582 = vld [vmem:[#allocation2 + $0x4] sm:$0xff]
        %v583 = vld [vmem:[#allocation2 + $0x14] sm:$0xff]
        %v584 = vld [vmem:[#allocation2 + $0x4] sm:$0xff]
        %v585 = vld [vmem:[#allocation2 + $0xc] sm:$0xf]
        %v586 = vld [vmem:[#allocation2 + $0x14] sm:$0xff]
        %v587 = vld [vmem:[#allocation2 + $0x1c] sm:$0xf]
        %v588 = vsel %vm420, 1, 0
        %v589 = vsel %vm421, 1, 0
        %vm590 = vcmp.eq.s32.totalorder %v588, 1
        %vm591 = vcmp.eq.s32.totalorder %v589, 1
        %vm592 = vmpackc.low %vm591, %vm590
        %v593 = vsel %vm592, 65537, 0
        %594 = vrot.lane.b32.xlu0 %v593, 1
        %v595 = vpop.permute.xlu0 %594
        %v596 = vrot.slane %v595, 4
        %vm597 = vcmask 7168
        %v598 = vsel %vm597, %v596, %v595
        %v599 = vunpack.c.l.b16 %v598
        %v600 = vunpack.c.h.b16 %v598
        %v601 = vunpack.c.l.b16 0
        %v602 = vunpack.c.h.b16 0
        %vm603 = vcmp.ne.s32.totalorder %v599, %v601
        %vm604 = vcmp.ne.s32.totalorder %v600, %v602
        %vm605 = vmpackc.low %vm604, %vm603
        %v606 = vunpack.c.l.b16 %v596
        %v607 = vunpack.c.h.b16 %v596
        %v608 = vunpack.c.l.b16 0
        %v609 = vunpack.c.h.b16 0
        %vm610 = vcmp.ne.s32.totalorder %v606, %v608
        %vm611 = vcmp.ne.s32.totalorder %v607, %v609
        %vm612 = vmpackc.low %vm611, %vm610
        %v613 = vsel %vm605, %v584, 0
        %v614 = vsel %vm612, %v585, 0
        %v615 = vsel %vm605, %v586, 0
        %v616 = vsel %vm612, %v587, 0
        %v617 = vsel %vm432, 1, 0
        %v618 = vsel %vm433, 1, 0
        %vm619 = vcmp.eq.s32.totalorder %v617, 1
        %vm620 = vcmp.eq.s32.totalorder %v618, 1
        %vm621 = vmpackc.low %vm620, %vm619
        %v622 = vsel %vm621, 65537, 0
        %623 = vrot.lane.b32.xlu0 %v622, 15
        %v624 = vpop.permute.xlu0 %623
        %v625 = vrot.slane %v624, 4
        %vm626 = vcmask 121856
        %v627 = vsel %vm626, %v625, %v624
        %v628 = vunpack.c.l.b16 %v627
        %v629 = vunpack.c.h.b16 %v627
        %v630 = vunpack.c.l.b16 0
        %v631 = vunpack.c.h.b16 0
        %vm632 = vcmp.ne.s32.totalorder %v628, %v630
        %vm633 = vcmp.ne.s32.totalorder %v629, %v631
        %vm634 = vmpackc.low %vm633, %vm632
        %v635 = vunpack.c.l.b16 %v625
        %v636 = vunpack.c.h.b16 %v625
        %v637 = vunpack.c.l.b16 0
        %v638 = vunpack.c.h.b16 0
        %vm639 = vcmp.ne.s32.totalorder %v635, %v637
        %vm640 = vcmp.ne.s32.totalorder %v636, %v638
        %vm641 = vmpackc.low %vm640, %vm639
        %v642 = vsel %vm634, %v584, 0
        %v643 = vsel %vm641, %v585, 0
        %v644 = vsel %vm634, %v586, 0
        %v645 = vsel %vm641, %v587, 0
        %v646 = vsel %vm440, 1, 0
        %v647 = vsel %vm441, 1, 0
        %vm648 = vcmp.eq.s32.totalorder %v646, 1
        %vm649 = vcmp.eq.s32.totalorder %v647, 1
        %vm650 = vmpackc.low %vm649, %vm648
        %v651 = vsel %vm650, 65537, 0
        %652 = vrot.lane.b32.xlu0 %v651, 16
        %v653 = vpop.permute.xlu0 %652
        %v654 = vrot.slane %v653, 4
        %vm655 = vcmask 130048
        %v656 = vsel %vm655, %v654, %v653
        %v657 = vunpack.c.l.b16 %v656
        %v658 = vunpack.c.h.b16 %v656
        %v659 = vunpack.c.l.b16 0
        %v660 = vunpack.c.h.b16 0
        %vm661 = vcmp.ne.s32.totalorder %v657, %v659
        %vm662 = vcmp.ne.s32.totalorder %v658, %v660
        %vm663 = vmpackc.low %vm662, %vm661
        %v664 = vunpack.c.l.b16 %v654
        %v665 = vunpack.c.h.b16 %v654
        %v666 = vunpack.c.l.b16 0
        %v667 = vunpack.c.h.b16 0
        %vm668 = vcmp.ne.s32.totalorder %v664, %v666
        %vm669 = vcmp.ne.s32.totalorder %v665, %v667
        %vm670 = vmpackc.low %vm669, %vm668
        %v671 = vsel %vm663, %v584, 0
        %v672 = vsel %vm670, %v585, 0
        %v673 = vsel %vm663, %v586, 0
        %v674 = vsel %vm670, %v587, 0
        %v675 = vsel %vm452, 1, 0
        %v676 = vsel %vm453, 1, 0
        %vm677 = vcmp.eq.s32.totalorder %v675, 1
        %vm678 = vcmp.eq.s32.totalorder %v676, 1
        %vm679 = vmpackc.low %vm678, %vm677
        %v680 = vsel %vm679, 65537, 0
        %681 = vrot.lane.b32.xlu0 %v680, 17
        %v682 = vpop.permute.xlu0 %681
        %v683 = vrot.slane %v682, 4
        %vm684 = vcmask 138240
        %v685 = vsel %vm684, %v683, %v682
        %v686 = vunpack.c.l.b16 %v685
        %v687 = vunpack.c.h.b16 %v685
        %v688 = vunpack.c.l.b16 0
        %v689 = vunpack.c.h.b16 0
        %vm690 = vcmp.ne.s32.totalorder %v686, %v688
        %vm691 = vcmp.ne.s32.totalorder %v687, %v689
        %vm692 = vmpackc.low %vm691, %vm690
        %v693 = vunpack.c.l.b16 %v683
        %v694 = vunpack.c.h.b16 %v683
        %v695 = vunpack.c.l.b16 0
        %v696 = vunpack.c.h.b16 0
        %vm697 = vcmp.ne.s32.totalorder %v693, %v695
        %vm698 = vcmp.ne.s32.totalorder %v694, %v696
        %vm699 = vmpackc.low %vm698, %vm697
        %v700 = vsel %vm692, %v584, 0
        %v701 = vsel %vm699, %v585, 0
        %v702 = vsel %vm692, %v586, 0
        %v703 = vsel %vm699, %v587, 0
        %v708 = vunpack.c.l.b16 %v491
        %v709 = vunpack.c.h.b16 %v491
        %v710 = vunpack.c.l.b16 %v492
        %v711 = vunpack.c.l.b16 %v493
        %v712 = vunpack.c.h.b16 %v493
        %v713 = vunpack.c.l.b16 %v494
        %v714 = vpack.c.b16 %v711, %v708
        %v715 = vpack.c.b16 %v712, %v709
        %v716 = vpack.c.b16 %v713, %v710
        %v721 = vunpack.c.l.b16 %v520
        %v722 = vunpack.c.h.b16 %v520
        %v723 = vunpack.c.l.b16 %v521
        %v724 = vunpack.c.l.b16 %v522
        %v725 = vunpack.c.h.b16 %v522
        %v726 = vunpack.c.l.b16 %v523
        %v727 = vpack.c.b16 %v724, %v721
        %v728 = vpack.c.b16 %v725, %v722
        %v729 = vpack.c.b16 %v726, %v723
        %730 = vrot.lane.b32.xlu0 %v727, 127
        %v731 = vpop.permute.xlu0 %730
        %732 = vrot.lane.b32.xlu0 %v728, 127
        %v733 = vpop.permute.xlu0 %732
        %734 = vrot.lane.b32.xlu0 %v729, 127
        %v735 = vpop.permute.xlu0 %734
        %v736 = vsel %vm562, %v731, %v733
        %v737 = vsel %vm562, %v733, %v735
        %v742 = vunpack.c.l.b16 %v549
        %v743 = vunpack.c.h.b16 %v549
        %v744 = vunpack.c.l.b16 %v550
        %v745 = vunpack.c.l.b16 %v551
        %v746 = vunpack.c.h.b16 %v551
        %v747 = vunpack.c.l.b16 %v552
        %v748 = vpack.c.b16 %v745, %v742
        %v749 = vpack.c.b16 %v746, %v743
        %v750 = vpack.c.b16 %v747, %v744
        %751 = vrot.lane.b32.xlu0 %v748, 126
        %v752 = vpop.permute.xlu0 %751
        %753 = vrot.lane.b32.xlu0 %v749, 126
        %v754 = vpop.permute.xlu0 %753
        %755 = vrot.lane.b32.xlu0 %v750, 126
        %v756 = vpop.permute.xlu0 %755
        %vm757 = vcmask 1031168
        %v758 = vsel %vm757, %v752, %v754
        %v759 = vsel %vm757, %v754, %v756
        %v764 = vunpack.c.l.b16 %v578
        %v765 = vunpack.c.h.b16 %v578
        %v766 = vunpack.c.l.b16 %v579
        %v767 = vunpack.c.l.b16 %v580
        %v768 = vunpack.c.h.b16 %v580
        %v769 = vunpack.c.l.b16 %v581
        %v770 = vpack.c.b16 %v767, %v764
        %v771 = vpack.c.b16 %v768, %v765
        %v772 = vpack.c.b16 %v769, %v766
        %773 = vrot.lane.b32.xlu0 %v770, 112
        %v774 = vpop.permute.xlu0 %773
        %775 = vrot.lane.b32.xlu0 %v771, 112
        %v776 = vpop.permute.xlu0 %775
        %777 = vrot.lane.b32.xlu0 %v772, 112
        %v778 = vpop.permute.xlu0 %777
        %v779 = vsel %vm504, %v774, %v776
        %v780 = vsel %vm504, %v776, %v778
        %v783 = vunpack.c.l.b16 %v582
        %v784 = vunpack.c.h.b16 %v582
        %v785 = vunpack.c.l.b16 %v583
        %v786 = vunpack.c.h.b16 %v583
        %v787 = vpack.c.b16 %v785, %v783
        %v788 = vpack.c.b16 %v786, %v784
        %789 = vrot.lane.b32.xlu0 %v787, 111
        %v790 = vpop.permute.xlu0 %789
        %791 = vrot.lane.b32.xlu0 %v788, 111
        %v792 = vpop.permute.xlu0 %791
        %v793 = vsel %vm475, %v790, %v792
        %v798 = vunpack.c.l.b16 %v613
        %v799 = vunpack.c.h.b16 %v613
        %v800 = vunpack.c.l.b16 %v614
        %v801 = vunpack.c.l.b16 %v615
        %v802 = vunpack.c.h.b16 %v615
        %v803 = vunpack.c.l.b16 %v616
        %v804 = vpack.c.b16 %v801, %v798
        %v805 = vpack.c.b16 %v802, %v799
        %v806 = vpack.c.b16 %v803, %v800
        %807 = vrot.lane.b32.xlu0 %v804, 110
        %v808 = vpop.permute.xlu0 %807
        %809 = vrot.lane.b32.xlu0 %v805, 110
        %v810 = vpop.permute.xlu0 %809
        %811 = vrot.lane.b32.xlu0 %v806, 110
        %v812 = vpop.permute.xlu0 %811
        %vm813 = vcmask 900096
        %v814 = vsel %vm813, %v808, %v810
        %v815 = vsel %vm813, %v810, %v812
        %v820 = vunpack.c.l.b16 %v642
        %v821 = vunpack.c.h.b16 %v642
        %v822 = vunpack.c.l.b16 %v643
        %v823 = vunpack.c.l.b16 %v644
        %v824 = vunpack.c.h.b16 %v644
        %v825 = vunpack.c.l.b16 %v645
        %v826 = vpack.c.b16 %v823, %v820
        %v827 = vpack.c.b16 %v824, %v821
        %v828 = vpack.c.b16 %v825, %v822
        %829 = vrot.lane.b32.xlu0 %v826, 96
        %v830 = vpop.permute.xlu0 %829
        %831 = vrot.lane.b32.xlu0 %v827, 96
        %v832 = vpop.permute.xlu0 %831
        %833 = vrot.lane.b32.xlu0 %v828, 96
        %v834 = vpop.permute.xlu0 %833
        %vm835 = vcmask 785408
        %v836 = vsel %vm835, %v830, %v832
        %v837 = vsel %vm835, %v832, %v834
        %v842 = vunpack.c.l.b16 %v671
        %v843 = vunpack.c.h.b16 %v671
        %v844 = vunpack.c.l.b16 %v672
        %v845 = vunpack.c.l.b16 %v673
        %v846 = vunpack.c.h.b16 %v673
        %v847 = vunpack.c.l.b16 %v674
        %v848 = vpack.c.b16 %v845, %v842
        %v849 = vpack.c.b16 %v846, %v843
        %v850 = vpack.c.b16 %v847, %v844
        %851 = vrot.lane.b32.xlu0 %v848, 95
        %v852 = vpop.permute.xlu0 %851
        %853 = vrot.lane.b32.xlu0 %v849, 95
        %v854 = vpop.permute.xlu0 %853
        %855 = vrot.lane.b32.xlu0 %v850, 95
        %v856 = vpop.permute.xlu0 %855
        %vm857 = vcmask 777216
        %v858 = vsel %vm857, %v852, %v854
        %v859 = vsel %vm857, %v854, %v856
        %v864 = vunpack.c.l.b16 %v700
        %v865 = vunpack.c.h.b16 %v700
        %v866 = vunpack.c.l.b16 %v701
        %v867 = vunpack.c.l.b16 %v702
        %v868 = vunpack.c.h.b16 %v702
        %v869 = vunpack.c.l.b16 %v703
        %v870 = vpack.c.b16 %v867, %v864
        %v871 = vpack.c.b16 %v868, %v865
        %v872 = vpack.c.b16 %v869, %v866
        %873 = vrot.lane.b32.xlu0 %v870, 94
        %v874 = vpop.permute.xlu0 %873
        %875 = vrot.lane.b32.xlu0 %v871, 94
        %v876 = vpop.permute.xlu0 %875
        %877 = vrot.lane.b32.xlu0 %v872, 94
        %v878 = vpop.permute.xlu0 %877
        %vm879 = vcmask 769024
        %v880 = vsel %vm879, %v874, %v876
        %v881 = vsel %vm879, %v876, %v878
        %v882 = vld [vmem:[#allocation8] sm:$0xff]
        %v883 = vld [vmem:[#allocation8 + $0x8] sm:$0xff]
        %v886 = vunpack.c.l.b16 %v882
        %v887 = vunpack.c.h.b16 %v882
        %v888 = vunpack.c.l.b16 %v883
        %v889 = vunpack.c.h.b16 %v883
        %v890 = vpack.c.b16 %v888, %v886
        %v891 = vpack.c.b16 %v889, %v887
        %893 = vrot.lane.b32.xlu0 %v714, 17
        %v894 = vpop.permute.xlu0 %893
        %895 = vrot.lane.b32.xlu0 %v715, 17
        %v896 = vpop.permute.xlu0 %895
        %897 = vrot.lane.b32.xlu0 %v716, 17
        %v898 = vpop.permute.xlu0 %897
        %899 = vrot.lane.b32.xlu0 %v736, 17
        %v900 = vpop.permute.xlu0 %899
        %901 = vrot.lane.b32.xlu0 %v737, 17
        %v902 = vpop.permute.xlu0 %901
        %903 = vrot.lane.b32.xlu0 %v735, 17
        %v904 = vpop.permute.xlu0 %903
        %905 = vrot.lane.b32.xlu0 %v758, 17
        %v906 = vpop.permute.xlu0 %905
        %907 = vrot.lane.b32.xlu0 %v759, 17
        %v908 = vpop.permute.xlu0 %907
        %909 = vrot.lane.b32.xlu0 %v756, 17
        %v910 = vpop.permute.xlu0 %909
        %911 = vrot.lane.b32.xlu0 %v779, 17
        %v912 = vpop.permute.xlu0 %911
        %913 = vrot.lane.b32.xlu0 %v780, 17
        %v914 = vpop.permute.xlu0 %913
        %915 = vrot.lane.b32.xlu0 %v778, 17
        %v916 = vpop.permute.xlu0 %915
        %917 = vrot.lane.b32.xlu0 %v790, 17
        %v918 = vpop.permute.xlu0 %917
        %919 = vrot.lane.b32.xlu0 %v793, 17
        %v920 = vpop.permute.xlu0 %919
        %921 = vrot.lane.b32.xlu0 %v792, 17
        %v922 = vpop.permute.xlu0 %921
        %923 = vrot.lane.b32.xlu0 %v808, 17
        %v924 = vpop.permute.xlu0 %923
        %925 = vrot.lane.b32.xlu0 %v814, 17
        %v926 = vpop.permute.xlu0 %925
        %927 = vrot.lane.b32.xlu0 %v815, 17
        %v928 = vpop.permute.xlu0 %927
        %929 = vrot.lane.b32.xlu0 %v830, 17
        %v930 = vpop.permute.xlu0 %929
        %931 = vrot.lane.b32.xlu0 %v836, 17
        %v932 = vpop.permute.xlu0 %931
        %933 = vrot.lane.b32.xlu0 %v837, 17
        %v934 = vpop.permute.xlu0 %933
        %935 = vrot.lane.b32.xlu0 %v852, 17
        %v936 = vpop.permute.xlu0 %935
        %937 = vrot.lane.b32.xlu0 %v858, 17
        %v938 = vpop.permute.xlu0 %937
        %939 = vrot.lane.b32.xlu0 %v859, 17
        %v940 = vpop.permute.xlu0 %939
        %941 = vrot.lane.b32.xlu0 %v874, 17
        %v942 = vpop.permute.xlu0 %941
        %943 = vrot.lane.b32.xlu0 %v880, 17
        %v944 = vpop.permute.xlu0 %943
        %945 = vrot.lane.b32.xlu0 %v881, 17
        %v946 = vpop.permute.xlu0 %945
        %v947 = vsel %vm684, %v894, %v896
        %v948 = vsel %vm684, %v896, %v898
        %v949 = vsel %vm684, %v900, %v902
        %v950 = vsel %vm684, %v902, %v904
        %v951 = vsel %vm684, %v906, %v908
        %v952 = vsel %vm684, %v908, %v910
        %v953 = vsel %vm684, %v912, %v914
        %v954 = vsel %vm684, %v914, %v916
        %v955 = vsel %vm684, %v918, %v920
        %v956 = vsel %vm684, %v920, %v922
        %v957 = vsel %vm684, %v924, %v926
        %v958 = vsel %vm684, %v926, %v928
        %v959 = vsel %vm684, %v930, %v932
        %v960 = vsel %vm684, %v932, %v934
        %v961 = vsel %vm684, %v936, %v938
        %v962 = vsel %vm684, %v938, %v940
        %v963 = vsel %vm684, %v942, %v944
        %v964 = vsel %vm684, %v944, %v946
        %vm983 = vcmask 130048
        %v985 = vsel %vm983, %v891, 0
        %987 = vmatpush.bf16.msra.mxu0 %v961
        %988 = vmatpush.bf16.msra.mxu0 %v959
        %989 = vmatpush.bf16.msra.mxu0 %v957
        %990 = vmatpush.bf16.msra.mxu0 %v955
        %991 = vmatpush.bf16.msra.mxu0 %v953
        %992 = vmatpush.bf16.msra.mxu0 %v951
        %993 = vmatpush.bf16.msra.mxu0 %v949
        %994 = vmatpush.bf16.msra.mxu0 %v947
        %995 = vmatmul.bf16.gmra.mxu0 %v890
        %v996 = vpop.f32.mrf.mxu0
        %v997 = vadd.f32 0.0, %v996
        %v998 = vpop.f32.mrf.mxu0
        %v999 = vadd.f32 0.0, %v998
        %1000 = vdwg.mxu0
        %1001 = vmatpush.bf16.msra.mxu0 0
        %1002 = vmatpush.bf16.msra.mxu0 0
        %1003 = vmatpush.bf16.msra.mxu0 0
        %1004 = vmatpush.bf16.msra.mxu0 0
        %1005 = vmatpush.bf16.msra.mxu0 0
        %1006 = vmatpush.bf16.msra.mxu0 0
        %1007 = vmatpush.bf16.msra.mxu0 0
        %1008 = vmatpush.bf16.msra.mxu0 %v963
        %1009 = vmatmul.bf16.gmra.mxu0 %v985
        %v1010 = vpop.f32.mrf.mxu0
        %v1011 = vadd.f32 %v997, %v1010
        %v1012 = vpop.f32.mrf.mxu0
        %v1013 = vadd.f32 %v999, %v1012
        %1014 = vdwg.mxu0
        %1015 = vmatpush.bf16.msra.mxu0 %v962
        %1016 = vmatpush.bf16.msra.mxu0 %v960
        %1017 = vmatpush.bf16.msra.mxu0 %v958
        %1018 = vmatpush.bf16.msra.mxu0 %v956
        %1019 = vmatpush.bf16.msra.mxu0 %v954
        %1020 = vmatpush.bf16.msra.mxu0 %v952
        %1021 = vmatpush.bf16.msra.mxu0 %v950
        %1022 = vmatpush.bf16.msra.mxu0 %v948
        %1023 = vmatmul.bf16.gmra.mxu0 %v890
        %v1024 = vpop.f32.mrf.mxu0
        %v1025 = vadd.f32 0.0, %v1024
        %v1026 = vpop.f32.mrf.mxu0
        %v1027 = vadd.f32 0.0, %v1026
        %1028 = vdwg.mxu0
        %1029 = vmatpush.bf16.msra.mxu0 0
        %1030 = vmatpush.bf16.msra.mxu0 0
        %1031 = vmatpush.bf16.msra.mxu0 0
        %1032 = vmatpush.bf16.msra.mxu0 0
        %1033 = vmatpush.bf16.msra.mxu0 0
        %1034 = vmatpush.bf16.msra.mxu0 0
        %1035 = vmatpush.bf16.msra.mxu0 0
        %1036 = vmatpush.bf16.msra.mxu0 %v964
        %1037 = vmatmul.bf16.gmra.mxu0 %v985
        %v1038 = vpop.f32.mrf.mxu0
        %v1039 = vadd.f32 %v1025, %v1038
        %v1040 = vpop.f32.mrf.mxu0
        %v1041 = vadd.f32 %v1027, %v1040
        %1042 = vdwg.mxu0
        %s1043 = sld [smem:[#allocation4]]
        %vm1044 = vcmp.gt.f32.partialorder %v1011, 0.0
        %vm1045 = vcmp.gt.f32.partialorder %v1039, 0.0
        %vm1046 = vcmp.gt.f32.partialorder %v1013, 0.0
        %vm1047 = vcmp.gt.f32.partialorder %v1041, 0.0
        %v1048 = vstv %s1043
        %v1049 = vmul.f32 %v1048, %v1011
        %v1050 = vmul.f32 %v1048, %v1039
        %v1051 = vmul.f32 %v1048, %v1013
        %v1052 = vmul.f32 %v1048, %v1041
        %v1053 = vsel %vm1044, %v1011, %v1049
        %v1054 = vsel %vm1045, %v1039, %v1050
        %v1055 = vsel %vm1046, %v1013, %v1051
        %v1056 = vsel %vm1047, %v1041, %v1052
        %v1057 = vpack.c.bf16 %v1054, %v1053
        %v1058 = vpack.c.bf16 %v1056, %v1055
        %1059 = vst [vmem:[#allocation2 + $0x4] sm:$0xff] %v1057
        %1060 = vst [vmem:[#allocation2 + $0x14] sm:$0xff] %v1058
        %v1061 = vld [vmem:[#allocation2] sm:$0xff]
        %v1062 = vld [vmem:[#allocation2 + $0x8] sm:$0xf]
        %v1063 = vld [vmem:[#allocation2 + $0x10] sm:$0xff]
        %v1064 = vld [vmem:[#allocation2 + $0x18] sm:$0xf]
        %v1065 = vsel %vm483, %v1061, 0
        %v1066 = vsel %vm490, %v1062, 0
        %v1067 = vsel %vm483, %v1063, 0
        %v1068 = vsel %vm490, %v1064, 0
        %v1069 = vsel %vm512, %v1061, 0
        %v1070 = vsel %vm519, %v1062, 0
        %v1071 = vsel %vm512, %v1063, 0
        %v1072 = vsel %vm519, %v1064, 0
        %v1073 = vsel %vm541, %v1061, 0
        %v1074 = vsel %vm548, %v1062, 0
        %v1075 = vsel %vm541, %v1063, 0
        %v1076 = vsel %vm548, %v1064, 0
        %v1077 = vsel %vm570, %v1061, 0
        %v1078 = vsel %vm577, %v1062, 0
        %v1079 = vsel %vm570, %v1063, 0
        %v1080 = vsel %vm577, %v1064, 0
        %v1081 = vld [vmem:[#allocation2 + $0x4] sm:$0xff]
        %v1082 = vld [vmem:[#allocation2 + $0x14] sm:$0xff]
        %v1083 = vld [vmem:[#allocation2 + $0x4] sm:$0xff]
        %v1084 = vld [vmem:[#allocation2 + $0xc] sm:$0xf]
        %v1085 = vld [vmem:[#allocation2 + $0x14] sm:$0xff]
        %v1086 = vld [vmem:[#allocation2 + $0x1c] sm:$0xf]
        %v1087 = vsel %vm605, %v1083, 0
        %v1088 = vsel %vm612, %v1084, 0
        %v1089 = vsel %vm605, %v1085, 0
        %v1090 = vsel %vm612, %v1086, 0
        %v1091 = vsel %vm634, %v1083, 0
        %v1092 = vsel %vm641, %v1084, 0
        %v1093 = vsel %vm634, %v1085, 0
        %v1094 = vsel %vm641, %v1086, 0
        %v1095 = vsel %vm663, %v1083, 0
        %v1096 = vsel %vm670, %v1084, 0
        %v1097 = vsel %vm663, %v1085, 0
        %v1098 = vsel %vm670, %v1086, 0
        %v1099 = vsel %vm692, %v1083, 0
        %v1100 = vsel %vm699, %v1084, 0
        %v1101 = vsel %vm692, %v1085, 0
        %v1102 = vsel %vm699, %v1086, 0
        %v1107 = vunpack.c.l.b16 %v1065
        %v1108 = vunpack.c.h.b16 %v1065
        %v1109 = vunpack.c.l.b16 %v1066
        %v1110 = vunpack.c.l.b16 %v1067
        %v1111 = vunpack.c.h.b16 %v1067
        %v1112 = vunpack.c.l.b16 %v1068
        %v1113 = vpack.c.b16 %v1110, %v1107
        %v1114 = vpack.c.b16 %v1111, %v1108
        %v1115 = vpack.c.b16 %v1112, %v1109
        %v1120 = vunpack.c.l.b16 %v1069
        %v1121 = vunpack.c.h.b16 %v1069
        %v1122 = vunpack.c.l.b16 %v1070
        %v1123 = vunpack.c.l.b16 %v1071
        %v1124 = vunpack.c.h.b16 %v1071
        %v1125 = vunpack.c.l.b16 %v1072
        %v1126 = vpack.c.b16 %v1123, %v1120
        %v1127 = vpack.c.b16 %v1124, %v1121
        %v1128 = vpack.c.b16 %v1125, %v1122
        %1129 = vrot.lane.b32.xlu0 %v1126, 127
        %v1130 = vpop.permute.xlu0 %1129
        %1131 = vrot.lane.b32.xlu0 %v1127, 127
        %v1132 = vpop.permute.xlu0 %1131
        %1133 = vrot.lane.b32.xlu0 %v1128, 127
        %v1134 = vpop.permute.xlu0 %1133
        %v1135 = vsel %vm562, %v1130, %v1132
        %v1136 = vsel %vm562, %v1132, %v1134
        %v1141 = vunpack.c.l.b16 %v1073
        %v1142 = vunpack.c.h.b16 %v1073
        %v1143 = vunpack.c.l.b16 %v1074
        %v1144 = vunpack.c.l.b16 %v1075
        %v1145 = vunpack.c.h.b16 %v1075
        %v1146 = vunpack.c.l.b16 %v1076
        %v1147 = vpack.c.b16 %v1144, %v1141
        %v1148 = vpack.c.b16 %v1145, %v1142
        %v1149 = vpack.c.b16 %v1146, %v1143
        %1150 = vrot.lane.b32.xlu0 %v1147, 126
        %v1151 = vpop.permute.xlu0 %1150
        %1152 = vrot.lane.b32.xlu0 %v1148, 126
        %v1153 = vpop.permute.xlu0 %1152
        %1154 = vrot.lane.b32.xlu0 %v1149, 126
        %v1155 = vpop.permute.xlu0 %1154
        %v1156 = vsel %vm757, %v1151, %v1153
        %v1157 = vsel %vm757, %v1153, %v1155
        %v1162 = vunpack.c.l.b16 %v1077
        %v1163 = vunpack.c.h.b16 %v1077
        %v1164 = vunpack.c.l.b16 %v1078
        %v1165 = vunpack.c.l.b16 %v1079
        %v1166 = vunpack.c.h.b16 %v1079
        %v1167 = vunpack.c.l.b16 %v1080
        %v1168 = vpack.c.b16 %v1165, %v1162
        %v1169 = vpack.c.b16 %v1166, %v1163
        %v1170 = vpack.c.b16 %v1167, %v1164
        %1171 = vrot.lane.b32.xlu0 %v1168, 112
        %v1172 = vpop.permute.xlu0 %1171
        %1173 = vrot.lane.b32.xlu0 %v1169, 112
        %v1174 = vpop.permute.xlu0 %1173
        %1175 = vrot.lane.b32.xlu0 %v1170, 112
        %v1176 = vpop.permute.xlu0 %1175
        %v1177 = vsel %vm504, %v1172, %v1174
        %v1178 = vsel %vm504, %v1174, %v1176
        %v1181 = vunpack.c.l.b16 %v1081
        %v1182 = vunpack.c.h.b16 %v1081
        %v1183 = vunpack.c.l.b16 %v1082
        %v1184 = vunpack.c.h.b16 %v1082
        %v1185 = vpack.c.b16 %v1183, %v1181
        %v1186 = vpack.c.b16 %v1184, %v1182
        %1187 = vrot.lane.b32.xlu0 %v1185, 111
        %v1188 = vpop.permute.xlu0 %1187
        %1189 = vrot.lane.b32.xlu0 %v1186, 111
        %v1190 = vpop.permute.xlu0 %1189
        %v1191 = vsel %vm475, %v1188, %v1190
        %v1196 = vunpack.c.l.b16 %v1087
        %v1197 = vunpack.c.h.b16 %v1087
        %v1198 = vunpack.c.l.b16 %v1088
        %v1199 = vunpack.c.l.b16 %v1089
        %v1200 = vunpack.c.h.b16 %v1089
        %v1201 = vunpack.c.l.b16 %v1090
        %v1202 = vpack.c.b16 %v1199, %v1196
        %v1203 = vpack.c.b16 %v1200, %v1197
        %v1204 = vpack.c.b16 %v1201, %v1198
        %1205 = vrot.lane.b32.xlu0 %v1202, 110
        %v1206 = vpop.permute.xlu0 %1205
        %1207 = vrot.lane.b32.xlu0 %v1203, 110
        %v1208 = vpop.permute.xlu0 %1207
        %1209 = vrot.lane.b32.xlu0 %v1204, 110
        %v1210 = vpop.permute.xlu0 %1209
        %v1211 = vsel %vm813, %v1206, %v1208
        %v1212 = vsel %vm813, %v1208, %v1210
        %v1217 = vunpack.c.l.b16 %v1091
        %v1218 = vunpack.c.h.b16 %v1091
        %v1219 = vunpack.c.l.b16 %v1092
        %v1220 = vunpack.c.l.b16 %v1093
        %v1221 = vunpack.c.h.b16 %v1093
        %v1222 = vunpack.c.l.b16 %v1094
        %v1223 = vpack.c.b16 %v1220, %v1217
        %v1224 = vpack.c.b16 %v1221, %v1218
        %v1225 = vpack.c.b16 %v1222, %v1219
        %1226 = vrot.lane.b32.xlu0 %v1223, 96
        %v1227 = vpop.permute.xlu0 %1226
        %1228 = vrot.lane.b32.xlu0 %v1224, 96
        %v1229 = vpop.permute.xlu0 %1228
        %1230 = vrot.lane.b32.xlu0 %v1225, 96
        %v1231 = vpop.permute.xlu0 %1230
        %v1232 = vsel %vm835, %v1227, %v1229
        %v1233 = vsel %vm835, %v1229, %v1231
        %v1238 = vunpack.c.l.b16 %v1095
        %v1239 = vunpack.c.h.b16 %v1095
        %v1240 = vunpack.c.l.b16 %v1096
        %v1241 = vunpack.c.l.b16 %v1097
        %v1242 = vunpack.c.h.b16 %v1097
        %v1243 = vunpack.c.l.b16 %v1098
        %v1244 = vpack.c.b16 %v1241, %v1238
        %v1245 = vpack.c.b16 %v1242, %v1239
        %v1246 = vpack.c.b16 %v1243, %v1240
        %1247 = vrot.lane.b32.xlu0 %v1244, 95
        %v1248 = vpop.permute.xlu0 %1247
        %1249 = vrot.lane.b32.xlu0 %v1245, 95
        %v1250 = vpop.permute.xlu0 %1249
        %1251 = vrot.lane.b32.xlu0 %v1246, 95
        %v1252 = vpop.permute.xlu0 %1251
        %v1253 = vsel %vm857, %v1248, %v1250
        %v1254 = vsel %vm857, %v1250, %v1252
        %v1259 = vunpack.c.l.b16 %v1099
        %v1260 = vunpack.c.h.b16 %v1099
        %v1261 = vunpack.c.l.b16 %v1100
        %v1262 = vunpack.c.l.b16 %v1101
        %v1263 = vunpack.c.h.b16 %v1101
        %v1264 = vunpack.c.l.b16 %v1102
        %v1265 = vpack.c.b16 %v1262, %v1259
        %v1266 = vpack.c.b16 %v1263, %v1260
        %v1267 = vpack.c.b16 %v1264, %v1261
        %1268 = vrot.lane.b32.xlu0 %v1265, 94
        %v1269 = vpop.permute.xlu0 %1268
        %1270 = vrot.lane.b32.xlu0 %v1266, 94
        %v1271 = vpop.permute.xlu0 %1270
        %1272 = vrot.lane.b32.xlu0 %v1267, 94
        %v1273 = vpop.permute.xlu0 %1272
        %v1274 = vsel %vm879, %v1269, %v1271
        %v1275 = vsel %vm879, %v1271, %v1273
        %v1276 = vld [vmem:[#allocation10] sm:$0xff]
        %v1277 = vld [vmem:[#allocation10 + $0x8] sm:$0xff]
        %v1280 = vunpack.c.l.b16 %v1276
        %v1281 = vunpack.c.h.b16 %v1276
        %v1282 = vunpack.c.l.b16 %v1277
        %v1283 = vunpack.c.h.b16 %v1277
        %v1284 = vpack.c.b16 %v1282, %v1280
        %v1285 = vpack.c.b16 %v1283, %v1281
        %1287 = vrot.lane.b32.xlu0 %v1113, 17
        %v1288 = vpop.permute.xlu0 %1287
        %1289 = vrot.lane.b32.xlu0 %v1114, 17
        %v1290 = vpop.permute.xlu0 %1289
        %1291 = vrot.lane.b32.xlu0 %v1115, 17
        %v1292 = vpop.permute.xlu0 %1291
        %1293 = vrot.lane.b32.xlu0 %v1135, 17
        %v1294 = vpop.permute.xlu0 %1293
        %1295 = vrot.lane.b32.xlu0 %v1136, 17
        %v1296 = vpop.permute.xlu0 %1295
        %1297 = vrot.lane.b32.xlu0 %v1134, 17
        %v1298 = vpop.permute.xlu0 %1297
        %1299 = vrot.lane.b32.xlu0 %v1156, 17
        %v1300 = vpop.permute.xlu0 %1299
        %1301 = vrot.lane.b32.xlu0 %v1157, 17
        %v1302 = vpop.permute.xlu0 %1301
        %1303 = vrot.lane.b32.xlu0 %v1155, 17
        %v1304 = vpop.permute.xlu0 %1303
        %1305 = vrot.lane.b32.xlu0 %v1177, 17
        %v1306 = vpop.permute.xlu0 %1305
        %1307 = vrot.lane.b32.xlu0 %v1178, 17
        %v1308 = vpop.permute.xlu0 %1307
        %1309 = vrot.lane.b32.xlu0 %v1176, 17
        %v1310 = vpop.permute.xlu0 %1309
        %1311 = vrot.lane.b32.xlu0 %v1188, 17
        %v1312 = vpop.permute.xlu0 %1311
        %1313 = vrot.lane.b32.xlu0 %v1191, 17
        %v1314 = vpop.permute.xlu0 %1313
        %1315 = vrot.lane.b32.xlu0 %v1190, 17
        %v1316 = vpop.permute.xlu0 %1315
        %1317 = vrot.lane.b32.xlu0 %v1206, 17
        %v1318 = vpop.permute.xlu0 %1317
        %1319 = vrot.lane.b32.xlu0 %v1211, 17
        %v1320 = vpop.permute.xlu0 %1319
        %1321 = vrot.lane.b32.xlu0 %v1212, 17
        %v1322 = vpop.permute.xlu0 %1321
        %1323 = vrot.lane.b32.xlu0 %v1227, 17
        %v1324 = vpop.permute.xlu0 %1323
        %1325 = vrot.lane.b32.xlu0 %v1232, 17
        %v1326 = vpop.permute.xlu0 %1325
        %1327 = vrot.lane.b32.xlu0 %v1233, 17
        %v1328 = vpop.permute.xlu0 %1327
        %1329 = vrot.lane.b32.xlu0 %v1248, 17
        %v1330 = vpop.permute.xlu0 %1329
        %1331 = vrot.lane.b32.xlu0 %v1253, 17
        %v1332 = vpop.permute.xlu0 %1331
        %1333 = vrot.lane.b32.xlu0 %v1254, 17
        %v1334 = vpop.permute.xlu0 %1333
        %1335 = vrot.lane.b32.xlu0 %v1269, 17
        %v1336 = vpop.permute.xlu0 %1335
        %1337 = vrot.lane.b32.xlu0 %v1274, 17
        %v1338 = vpop.permute.xlu0 %1337
        %1339 = vrot.lane.b32.xlu0 %v1275, 17
        %v1340 = vpop.permute.xlu0 %1339
        %v1341 = vsel %vm684, %v1288, %v1290
        %v1342 = vsel %vm684, %v1290, %v1292
        %v1343 = vsel %vm684, %v1294, %v1296
        %v1344 = vsel %vm684, %v1296, %v1298
        %v1345 = vsel %vm684, %v1300, %v1302
        %v1346 = vsel %vm684, %v1302, %v1304
        %v1347 = vsel %vm684, %v1306, %v1308
        %v1348 = vsel %vm684, %v1308, %v1310
        %v1349 = vsel %vm684, %v1312, %v1314
        %v1350 = vsel %vm684, %v1314, %v1316
        %v1351 = vsel %vm684, %v1318, %v1320
        %v1352 = vsel %vm684, %v1320, %v1322
        %v1353 = vsel %vm684, %v1324, %v1326
        %v1354 = vsel %vm684, %v1326, %v1328
        %v1355 = vsel %vm684, %v1330, %v1332
        %v1356 = vsel %vm684, %v1332, %v1334
        %v1357 = vsel %vm684, %v1336, %v1338
        %v1358 = vsel %vm684, %v1338, %v1340
        %v1378 = vsel %vm983, %v1285, 0
        %1380 = vmatpush.bf16.msra.mxu0 %v1355
        %1381 = vmatpush.bf16.msra.mxu0 %v1353
        %1382 = vmatpush.bf16.msra.mxu0 %v1351
        %1383 = vmatpush.bf16.msra.mxu0 %v1349
        %1384 = vmatpush.bf16.msra.mxu0 %v1347
        %1385 = vmatpush.bf16.msra.mxu0 %v1345
        %1386 = vmatpush.bf16.msra.mxu0 %v1343
        %1387 = vmatpush.bf16.msra.mxu0 %v1341
        %1388 = vmatmul.bf16.gmra.mxu0 %v1284
        %v1389 = vpop.f32.mrf.mxu0
        %v1390 = vadd.f32 0.0, %v1389
        %v1391 = vpop.f32.mrf.mxu0
        %v1392 = vadd.f32 0.0, %v1391
        %1393 = vdwg.mxu0
        %1394 = vmatpush.bf16.msra.mxu0 0
        %1395 = vmatpush.bf16.msra.mxu0 0
        %1396 = vmatpush.bf16.msra.mxu0 0
        %1397 = vmatpush.bf16.msra.mxu0 0
        %1398 = vmatpush.bf16.msra.mxu0 0
        %1399 = vmatpush.bf16.msra.mxu0 0
        %1400 = vmatpush.bf16.msra.mxu0 0
        %1401 = vmatpush.bf16.msra.mxu0 %v1357
        %1402 = vmatmul.bf16.gmra.mxu0 %v1378
        %v1403 = vpop.f32.mrf.mxu0
        %v1404 = vadd.f32 %v1390, %v1403
        %v1405 = vpop.f32.mrf.mxu0
        %v1406 = vadd.f32 %v1392, %v1405
        %1407 = vdwg.mxu0
        %1408 = vmatpush.bf16.msra.mxu0 %v1356
        %1409 = vmatpush.bf16.msra.mxu0 %v1354
        %1410 = vmatpush.bf16.msra.mxu0 %v1352
        %1411 = vmatpush.bf16.msra.mxu0 %v1350
        %1412 = vmatpush.bf16.msra.mxu0 %v1348
        %1413 = vmatpush.bf16.msra.mxu0 %v1346
        %1414 = vmatpush.bf16.msra.mxu0 %v1344
        %1415 = vmatpush.bf16.msra.mxu0 %v1342
        %1416 = vmatmul.bf16.gmra.mxu0 %v1284
        %v1417 = vpop.f32.mrf.mxu0
        %v1418 = vadd.f32 0.0, %v1417
        %v1419 = vpop.f32.mrf.mxu0
        %v1420 = vadd.f32 0.0, %v1419
        %1421 = vdwg.mxu0
        %1422 = vmatpush.bf16.msra.mxu0 0
        %1423 = vmatpush.bf16.msra.mxu0 0
        %1424 = vmatpush.bf16.msra.mxu0 0
        %1425 = vmatpush.bf16.msra.mxu0 0
        %1426 = vmatpush.bf16.msra.mxu0 0
        %1427 = vmatpush.bf16.msra.mxu0 0
        %1428 = vmatpush.bf16.msra.mxu0 0
        %1429 = vmatpush.bf16.msra.mxu0 %v1358
        %1430 = vmatmul.bf16.gmra.mxu0 %v1378
        %v1431 = vpop.f32.mrf.mxu0
        %v1432 = vadd.f32 %v1418, %v1431
        %v1433 = vpop.f32.mrf.mxu0
        %v1434 = vadd.f32 %v1420, %v1433
        %1435 = vdwg.mxu0
        %v1436 = vadd.f32 %v1404, %v1432
        %1437 = vadd.xlane.f32.xlu0 %v1436
        %v1438 = vpop.xlane.xlu0 %1437
        %v1439 = vadd.f32 %v1406, %v1434
        %1440 = vadd.xlane.f32.xlu0 %v1439
        %v1441 = vpop.xlane.xlu0 %1440
        %v1442 = vrcp.pop 256.0
        %v1443 = vmul.f32 256.0, %v1442
        %v1444 = vsub.f32 1.0, %v1443
        %v1445 = vmul.f32 %v1442, %v1444
        %v1446 = vadd.f32 %v1442, %v1445
        %vm1447 = vweird.f32 %v1442
        %v1448 = vsel %vm1447, %v1442, %v1446
        %v1449 = vmul.f32 %v1438, %v1448
        %v1450 = vmul.f32 %v1441, %v1448
        %v1451 = vld [vmem:[#allocation11] sm:$0xff]
        %v1452 = vld [vmem:[#allocation11 + $0x8] sm:$0xff]
        %v1454 = vsel %vm983, %v1451, 0
        %v1457 = vsel %vm983, %v1452, 0
        %1459 = vmatpush.msra.mxu0 0.0
        %1460 = vmatpush.msra.mxu0 0.0
        %1461 = vmatpush.msra.mxu0 0.0
        %1462 = vmatpush.msra.mxu0 0.0
        %1463 = vmatpush.msra.mxu0 0.0
        %1464 = vmatpush.msra.mxu0 0.0
        %1465 = vmatpush.msra.mxu0 0.0
        %1466 = vmatpush.msra.mxu0 0.0
        %1467 = vmatpush.msra.mxu0 0.0
        %1468 = vmatpush.msra.mxu0 0.0
        %1469 = vmatpush.msra.mxu0 0.0
        %1470 = vmatpush.msra.mxu0 0.0
        %1471 = vmatpush.msra.mxu0 0.0
        %1472 = vmatpush.msra.mxu0 0.0
        %1473 = vmatpush.msra.mxu0 %v1450
        %1474 = vmatpush.msra.mxu0 %v1449
        %1475 = vmatmul.f32.gmra.mxu0 %v1454
        %v1476 = vpop.f32.mrf.mxu0
        %v1477 = vadd.f32 0.0, %v1476
        %1478 = vmatmul.f32.gmra.mxu0 %v1457
        %v1479 = vpop.f32.mrf.mxu0
        %v1480 = vadd.f32 0.0, %v1479
        %1481 = vdwg.mxu0
        %s1482 = sld [smem:[#allocation3]]
        %v1483 = vstv %s1482
        %v1484 = vadd.f32 %v1477, %v1483
        %v1485 = vadd.f32 %v1480, %v1483
        %v1486 = vxor.u32 %v1484, 2147483648
        %v1487 = vxor.u32 %v1485, 2147483648
        %v1488 = vmul.f32 %v1486, 1.442695
        %v1489 = vpow.pop %v1488
        %v1490 = vmul.f32 %v1487, 1.442695
        %v1491 = vpow.pop %v1490
        %v1492 = vadd.f32 %v1489, 1.0
        %v1493 = vadd.f32 %v1491, 1.0
        %v1494 = vrcp.pop %v1492
        %v1495 = vmul.f32 %v1492, %v1494
        %v1496 = vsub.f32 1.0, %v1495
        %v1497 = vmul.f32 %v1494, %v1496
        %v1498 = vadd.f32 %v1494, %v1497
        %vm1499 = vweird.f32 %v1492
        %vm1500 = vweird.f32 %v1494
        %vm1501 = vmor %vm1499, %vm1500
        %v1502 = vsel %vm1501, %v1494, %v1498
        %v1503 = vand.u32 2147483647, %v1492
        %vm1504 = vcmp.eq.f32.partialorder %v1503, 8.507059e+37
        %v1505 = vand.u32 %v1492, 2147483648
        %v1506 = vor.u32 1.1754944e-38, %v1505
        %v1507 = vsel %vm1504, %v1506, %v1502
        %v1508 = vmul.f32 1.0, %v1507
        %v1509 = vrcp.pop %v1493
        %v1510 = vmul.f32 %v1493, %v1509
        %v1511 = vsub.f32 1.0, %v1510
        %v1512 = vmul.f32 %v1509, %v1511
        %v1513 = vadd.f32 %v1509, %v1512
        %vm1514 = vweird.f32 %v1493
        %vm1515 = vweird.f32 %v1509
        %vm1516 = vmor %vm1514, %vm1515
        %v1517 = vsel %vm1516, %v1509, %v1513
        %v1518 = vand.u32 2147483647, %v1493
        %vm1519 = vcmp.eq.f32.partialorder %v1518, 8.507059e+37
        %v1520 = vand.u32 %v1493, 2147483648
        %v1521 = vor.u32 1.1754944e-38, %v1520
        %v1522 = vsel %vm1519, %v1521, %v1517
        %v1523 = vmul.f32 1.0, %v1522
        %1525 = vset.pattern.permute.xlu0 0
        %1526 = vperm.xlu0 %1525, %v1508
        %v1527 = vpop.permute.xlu0 %1526
        %1530 = vset.pattern.permute.xlu0 0
        %1531 = vperm.xlu0 %1530, %v1523
        %v1532 = vpop.permute.xlu0 %1531
        %v1534 = vmul.f32 %v1404, %v1527
        %v1535 = vmul.f32 %v1432, %v1527
        %v1536 = vmul.f32 %v1406, %v1532
        %v1537 = vmul.f32 %v1434, %v1532
        %v1538 = vld [vmem:[%s279] sm:$0xff]
        %v1539 = vld [vmem:[%s279 + $0x8] sm:$0xff]
        %v1540 = vld [vmem:[%s279 + $0x10] sm:$0xff]
        %v1541 = vld [vmem:[%s279 + $0x18] sm:$0xff]
        %v1542 = vadd.f32 %v1534, %v1538
        %v1543 = vadd.f32 %v1535, %v1539
        %v1544 = vadd.f32 %v1536, %v1540
        %v1545 = vadd.f32 %v1537, %v1541
        %1546 = vst [vmem:[%s323] sm:$0xff] %v1542
        %1547 = vst [vmem:[%s323 + $0x8] sm:$0xff] %v1543
        %1548 = vst [vmem:[%s323 + $0x10] sm:$0xff] %v1544
        %1549 = vst [vmem:[%s323 + $0x18] sm:$0xff] %v1545
        %s1550 = sand.u32 %s166, 1
        %s1551 = scalar_lea.sflag [#allocation7], %s1550
        %s1552 = sand.u32 %s166, 1
        %s1553 = smul.addr %s1552, 32
        %s1554 = scalar_lea.vmem [#allocation13], %s1553
        // Predicated region
        $region61: #{tpu_custom_call.1} parent=43 // pred_check
          %p1555 = pneg %p176
        $region62: #{tpu_custom_call.1} parent=43 // pred_check_branch
          %1557 = sbr.rel (%p1555) target = $region64
        $region63: #{tpu_custom_call.1} parent=43 // pred_region
          %1559 = vsyncadd %s1551, 0
          %s1560 = smul.addr %s27, 4
          %s1561 = smul.addr %s1560, 8
          %s1562 = scalar_lea.hbm %s6, %s1561
          %s1563 = sshll.u32 %s1554, 4
          %s1564 = int_to_ptr.vmem [resolvable:$true] %s1563
          %s1565 = sshll.u32 %s1562, 4
          %s1566 = int_to_ptr.hbm [resolvable:$true] %s1565
          %1571 = dma.vmem_to_hbm [thread:$0]  %s1564, 512, %s1566, %s1551, 256, 256, 16
        $region64: #{tpu_custom_call.1} parent=43 // pred_fallthru
          _
      $region44: #{tpu_custom_call.1} parent=5 // pred_fallthru
        _
      %p1572 = scmp.le.s32.totalorder 2, %s22
      // Predicated region
      $region65: #{tpu_custom_call.1} parent=5 // pred_check
        %p1573 = pneg %p1572
      $region66: #{tpu_custom_call.1} parent=5 // pred_check_branch
        %1575 = sbr.rel (%p1573) target = $region68
      $region67: #{tpu_custom_call.1} parent=5 // pred_region
        %s1576 = ssub.s32 %s22, 2
        // Predicated region
        $region69: #{tpu_custom_call.1} parent=67 // pred_check
          %p1577 = pneg %p182
        $region70: #{tpu_custom_call.1} parent=67 // pred_check_branch
          %1579 = sbr.rel (%p1577) target = $region72
        $region71: #{tpu_custom_call.1} parent=67 // pred_region
          %s1580 = sand.u32 %s167, 1
          %s1581 = scalar_lea.sflag [#allocation7], %s1580
          %s1582 = sand.u32 %s167, 1
          %s1583 = smul.addr %s1582, 32
          %s1584 = scalar_lea.vmem [#allocation13], %s1583
          %1586 = dma.done %s1581, 512
        $region72: #{tpu_custom_call.1} parent=67 // pred_fallthru
          _
      $region68: #{tpu_custom_call.1} parent=5 // pred_fallthru
        _
    $region6: #{tpu_custom_call.1} parent=1 // loop_footer
      %s26 = sadd.s32 1, %s22
    $region7: #{tpu_custom_call.1} parent=1 // loop_footer_branch
      %21 = sbr.rel target = $region3
    $region8: #{tpu_custom_call.1} parent=1 // loop_exit
      _
    %1587 = vsyncpa [#allocation6], 1
    %s1588 = scalar_lea.sflag [#allocation6], 1
    %1589 = vsyncpa %s1588, 1
    %1590 = vsyncpa [#allocation9], 1
    %1591 = vsyncpa [#allocation12], 1
    %1592 = vsyncpa [#allocation7], 1
    %s1593 = scalar_lea.sflag [#allocation7], 1
    %1594 = vsyncpa %s1593, 1

</llo_original>
